<compile_context>
chip_gen: v6e
topology: v6e:2x2x1
jax: 0.10.0
libtpu: 0.0.40
codegen_flags: <defaults>
</compile_context>

<pallas_src>
import jax
import jax.numpy as jnp
from jax.experimental import pallas as pl
from jax.experimental.pallas import tpu as pltpu


def discriminator_kernel(x_ref, w_ref, misc_ref, out_ref):
    # Operand layout (all resident in VMEM, single grid point):
    #   x_ref   : (T*B, F)   f32   time-major input, flattened over (T, B)
    #   w_ref   : (3H, 4H)   bf16  rows [0:H)=W_hh0, [H:2H)=W_ih1, [2H:3H)=W_hh1,
    #                              gate columns permuted to [i, f, o, g]
    #   misc_ref: (F+4, 4H)  f32   row 0 = b_ih0+b_hh0, row 1 = b_ih1+b_hh1,
    #                              rows 2..2+F-1 = W_ih0 (f32), row 2+F = w_lin (padded),
    #                              row 3+F = b_lin (lane 0)
    #   out_ref : (B, 1)     f32
    H4 = w_ref.shape[1]
    H = H4 // 4
    F = x_ref.shape[1]
    B = out_ref.shape[0]
    T = x_ref.shape[0] // B
    TB = T * B

    whh0 = w_ref[:H, :]            # (H, 4H)  bf16
    wih1 = w_ref[H:2 * H, :]       # (H, 4H)  bf16
    whh1 = w_ref[2 * H:, :]        # (H, 4H)  bf16

    # hoisted bias broadcast (JAX does not CSE broadcast_in_dim inside the loop)
    b1 = jnp.broadcast_to(misc_ref[1:2, :], (B, H4))          # (B, 4H) f32

    # Hoisted layer-0 input projection for ALL timesteps: F broadcast-FMAs on the VPU
    # (F is tiny), bias b0 folded in.  Full f32, and the MXU stays free for the
    # recurrent dots.
    xproj = jnp.broadcast_to(misc_ref[0:1, :], (TB, H4))
    for f in range(F):
        xproj = xproj + x_ref[:, f:f + 1] * misc_ref[2 + f:3 + f, :]

    def gate_math(gates, c):
        # gate columns pre-permuted to [i, f, o, g]; sigmoid via the tanh identity
        # (single EUP op per element instead of exp + reciprocal).
        sig = 0.5 * jnp.tanh(0.5 * gates[:, :3 * H]) + 0.5
        g = jnp.tanh(gates[:, 3 * H:])
        i, f, o = sig[:, :H], sig[:, H:2 * H], sig[:, 2 * H:]
        c_new = f * c + i * g
        h_new = o * jnp.tanh(c_new)
        return h_new, c_new

    zeros = jnp.zeros((B, H), jnp.float32)
    h0, c0, h1, c1 = zeros, zeros, zeros, zeros

    for t in range(T):                                   # static unroll: T is constant
        # layer-1 recurrent product FIRST: it only depends on the previous step's h1,
        # so it overlaps the entire layer-0 chain (independent MXU work).
        r1 = jnp.dot(h1.astype(jnp.bfloat16), whh1,
                     preferred_element_type=jnp.float32)
        # layer 0: single dependent matmul (input projection already hoisted)
        gates0 = (jnp.dot(h0.astype(jnp.bfloat16), whh0,
                          preferred_element_type=jnp.float32)
                  + xproj[t * B:(t + 1) * B, :])
        h0, c0 = gate_math(gates0, c0)
        # layer 1: input dot + precomputed recurrent part
        gates1 = (jnp.dot(h0.astype(jnp.bfloat16), wih1,
                          preferred_element_type=jnp.float32)
                  + r1 + b1)
        h1, c1 = gate_math(gates1, c1)

    # final Linear(H -> 1): VPU multiply + lane reduce (skip an N=1 MXU push/pop)
    wl = misc_ref[2 + F:3 + F, :H]     # (1, H)
    bl = misc_ref[3 + F:4 + F, :1]     # (1, 1)
    out_ref[...] = jnp.sum(h1 * wl, axis=-1, keepdims=True) + bl


def _permute_gates(m, H):
    """Reorder the 4H gate axis (last axis) from PyTorch's [i, f, g, o] to [i, f, o, g]."""
    return jnp.concatenate([m[..., :2 * H], m[..., 3 * H:], m[..., 2 * H:3 * H]], axis=-1)


def prepare_params(params):
    """One-time packing of the module weights into the kernel's operand layout.

    Runs OUTSIDE the jitted forward so the per-call launch path is only the input
    transpose + pallas_call (perf feedback: hoist weight preprocessing out of the jit).
    Returns (w_bf16, misc_f32).
    """
    H = params["w_hh0"].shape[1]
    F = params["w_ih0"].shape[1]
    H4 = 4 * H

    # bf16 slab of the recurrent-path weights, pre-transposed to (in_dim, 4H)
    whh0 = _permute_gates(params["w_hh0"].T, H)
    wih1 = _permute_gates(params["w_ih1"].T, H)
    whh1 = _permute_gates(params["w_hh1"].T, H)
    w_bf16 = jnp.concatenate([whh0, wih1, whh1], axis=0).astype(jnp.bfloat16)   # (3H, 4H)

    # f32 slab: biases, layer-0 input weights (kept f32), final Linear weight/bias
    b0 = _permute_gates((params["b_ih0"] + params["b_hh0"]).reshape(1, H4), H)
    b1 = _permute_gates((params["b_ih1"] + params["b_hh1"]).reshape(1, H4), H)
    wih0 = _permute_gates(params["w_ih0"].T, H)                                 # (F, 4H)
    wl_row = jnp.pad(params["w_lin"].astype(jnp.float32), ((0, 0), (0, H4 - H)))
    bl_row = jnp.pad(params["b_lin"].reshape(1, 1).astype(jnp.float32),
                     ((0, 0), (0, H4 - 1)))
    misc = jnp.concatenate(
        [b0, b1, wih0, wl_row, bl_row], axis=0).astype(jnp.float32)             # (F+4, 4H)
    return w_bf16, misc


def init_params(key, num_cont_var=2, hidden_dim=32):
    """Deterministic synthetic parameters matching the PyTorch module's shapes."""
    H = hidden_dim
    keys = jax.random.split(key, 10)
    k = 1.0 / jnp.sqrt(jnp.float32(H))

    def u(kk, shape):
        return jax.random.uniform(kk, shape, jnp.float32, -k, k)

    return dict(
        w_ih0=u(keys[0], (4 * H, num_cont_var)),
        w_hh0=u(keys[1], (4 * H, H)),
        b_ih0=u(keys[2], (4 * H,)),
        b_hh0=u(keys[3], (4 * H,)),
        w_ih1=u(keys[4], (4 * H, H)),
        w_hh1=u(keys[5], (4 * H, H)),
        b_ih1=u(keys[6], (4 * H,)),
        b_hh1=u(keys[7], (4 * H,)),
        # nn.init.trunc_normal_ on the Linear layer
        w_lin=jax.random.truncated_normal(keys[8], -2.0, 2.0, (1, H), jnp.float32),
        b_lin=jax.random.truncated_normal(keys[9], -2.0, 2.0, (1,), jnp.float32),
    )


@jax.jit
def discriminator_forward(x_cont, w_bf16, misc):
    """x_cont: (B, T, F) batch-first, like the PyTorch module. Returns (B, 1) f32."""
    B, T, F = x_cont.shape
    # time-major, flattened over (T, B); stays f32 (input projection is full precision)
    x2d = jnp.transpose(x_cont, (1, 0, 2)).reshape(T * B, F).astype(jnp.float32)

    vmem = pl.BlockSpec(memory_space=pltpu.MemorySpace.VMEM)
    return pl.pallas_call(
        discriminator_kernel,
        out_shape=jax.ShapeDtypeStruct((B, 1), jnp.float32),
        in_specs=[vmem, vmem, vmem],
        out_specs=vmem,
    )(x2d, w_bf16, misc)


def discriminator_reference(x_cont, params, rec_dtype=jnp.float32):
    """Pure-JAX reference for torch.nn.LSTM(num_layers=2, batch_first=True) + Linear
    on the last timestep.

    `rec_dtype` is the dtype of the recurrent-path matmul operands (the kernel feeds
    them as bf16 with f32 accumulation); the layer-0 input projection stays f32 in
    both kernel and reference.
    """
    B, T, F = x_cont.shape
    H = params["w_hh0"].shape[1]

    def mm(a, w, dt):  # a @ w.T with operands in dt, f32 accumulation
        return jnp.dot(a.astype(dt), w.T.astype(dt),
                       preferred_element_type=jnp.float32)

    def cell(x_t, h, c, w_ih, w_hh, b_ih, b_hh, in_dtype):
        gates = mm(x_t, w_ih, in_dtype) + b_ih + mm(h, w_hh, rec_dtype) + b_hh
        i, f, g, o = jnp.split(gates, 4, axis=-1)
        i, f, o = jax.nn.sigmoid(i), jax.nn.sigmoid(f), jax.nn.sigmoid(o)
        g = jnp.tanh(g)
        c = f * c + i * g
        h = o * jnp.tanh(c)
        return h, c

    h0 = c0 = h1 = c1 = jnp.zeros((B, H), jnp.float32)
    for t in range(T):
        x_t = x_cont[:, t, :]
        h0, c0 = cell(x_t, h0, c0, params["w_ih0"], params["w_hh0"],
                      params["b_ih0"], params["b_hh0"], jnp.float32)
        h1, c1 = cell(h0, h1, c1, params["w_ih1"], params["w_hh1"],
                      params["b_ih1"], params["b_hh1"], rec_dtype)
    return h1 @ params["w_lin"].T + params["b_lin"]


if __name__ == "__main__":
    key = jax.random.PRNGKey(0)
    k_param, k_x = jax.random.split(key)

    B, T, F, H = 4, 8, 2, 32           # small shapes consistent with the module
    params = init_params(k_param, num_cont_var=F, hidden_dim=H)
    x_cont = jax.random.normal(k_x, (B, T, F), jnp.float32)

    # one-time weight packing, outside the jitted forward
    w_bf16, misc = prepare_params(params)

    out = jax.block_until_ready(discriminator_forward(x_cont, w_bf16, misc))
    assert out.shape == (B, 1), out.shape

    # Implementation check: reference mirroring the kernel's bf16 recurrent operands /
    # f32 accumulation and f32 input projection.
    ref_bf16 = discriminator_reference(x_cont, params, rec_dtype=jnp.bfloat16)
    assert jnp.allclose(out, ref_bf16, atol=3e-3, rtol=3e-3), (out, ref_bf16)

    # Semantic check vs. full-f32 nn.LSTM math; tolerance accounts for bf16 recurrent
    # operands accumulated over the 8-step recurrence.
    ref_f32 = discriminator_reference(x_cont, params, rec_dtype=jnp.float32)
    assert jnp.allclose(out, ref_f32, atol=5e-2, rtol=5e-2), (out, ref_f32)

    print("KERNEL_OK")
</pallas_src>

<mosaic_0001>
module attributes {stable_mosaic.version = 11 : i64} {
  func.func @discriminator_kernel(%arg0: memref<32x2xf32, #tpu.memory_space<vmem>>, %arg1: memref<96x128xbf16, #tpu.memory_space<vmem>>, %arg2: memref<6x128xf32, #tpu.memory_space<vmem>>, %arg3: memref<4x1xf32, #tpu.memory_space<vmem>>) attributes {dimension_semantics = [], scalar_prefetch = 0 : i64, scratch_operands = 0 : i64, tpu.core_type = #tpu.core_type<tc>} {
    %c0 = arith.constant 0 : index
    %c0_0 = arith.constant 0 : index
    %0 = vector.load %arg1[%c0, %c0_0] : memref<96x128xbf16, #tpu.memory_space<vmem>>, vector<32x128xbf16>
    %c32 = arith.constant 32 : index
    %c0_1 = arith.constant 0 : index
    %1 = vector.load %arg1[%c32, %c0_1] : memref<96x128xbf16, #tpu.memory_space<vmem>>, vector<32x128xbf16>
    %c64 = arith.constant 64 : index
    %c0_2 = arith.constant 0 : index
    %2 = vector.load %arg1[%c64, %c0_2] : memref<96x128xbf16, #tpu.memory_space<vmem>>, vector<32x128xbf16>
    %c1 = arith.constant 1 : index
    %c0_3 = arith.constant 0 : index
    %3 = vector.load %arg2[%c1, %c0_3] : memref<6x128xf32, #tpu.memory_space<vmem>>, vector<1x128xf32>
    %4 = vector.shape_cast %3 : vector<1x128xf32> to vector<1x128xf32>
    %5 = vector.broadcast %4 : vector<1x128xf32> to vector<4x128xf32>
    %c0_4 = arith.constant 0 : index
    %c0_5 = arith.constant 0 : index
    %6 = vector.load %arg2[%c0_4, %c0_5] : memref<6x128xf32, #tpu.memory_space<vmem>>, vector<1x128xf32>
    %7 = vector.shape_cast %6 : vector<1x128xf32> to vector<1x128xf32>
    %8 = vector.broadcast %7 : vector<1x128xf32> to vector<32x128xf32>
    %c0_6 = arith.constant 0 : index
    %c0_7 = arith.constant 0 : index
    %9 = vector.load %arg0[%c0_6, %c0_7] : memref<32x2xf32, #tpu.memory_space<vmem>>, vector<32x1xf32>
    %c2 = arith.constant 2 : index
    %c0_8 = arith.constant 0 : index
    %10 = vector.load %arg2[%c2, %c0_8] : memref<6x128xf32, #tpu.memory_space<vmem>>, vector<1x128xf32>
    %11 = vector.broadcast %9 : vector<32x1xf32> to vector<32x128xf32>
    %12 = vector.broadcast %10 : vector<1x128xf32> to vector<32x128xf32>
    %13 = arith.mulf %11, %12 : vector<32x128xf32>
    %14 = arith.addf %8, %13 : vector<32x128xf32>
    %c0_9 = arith.constant 0 : index
    %c1_10 = arith.constant 1 : index
    %15 = vector.load %arg0[%c0_9, %c1_10] : memref<32x2xf32, #tpu.memory_space<vmem>>, vector<32x1xf32>
    %c3 = arith.constant 3 : index
    %c0_11 = arith.constant 0 : index
    %16 = vector.load %arg2[%c3, %c0_11] : memref<6x128xf32, #tpu.memory_space<vmem>>, vector<1x128xf32>
    %17 = vector.broadcast %15 : vector<32x1xf32> to vector<32x128xf32>
    %18 = vector.broadcast %16 : vector<1x128xf32> to vector<32x128xf32>
    %19 = arith.mulf %17, %18 : vector<32x128xf32>
    %20 = arith.addf %14, %19 : vector<32x128xf32>
    %cst = arith.constant 0.000000e+00 : f32
    %21 = vector.broadcast %cst : f32 to vector<4x32xf32>
    %22 = arith.truncf %21 : vector<4x32xf32> to vector<4x32xbf16>
    %cst_12 = arith.constant dense<0.000000e+00> : vector<4x128xf32>
    %23 = tpu.matmul %22, %2, %cst_12 {dimension_numbers = #tpu.dot_dimension_numbers<[1], [0], [0], [1], [0, 0, 1, 1], [], []>} : vector<4x32xbf16>, vector<32x128xbf16>, vector<4x128xf32> -> vector<4x128xf32>
    %24 = arith.truncf %21 : vector<4x32xf32> to vector<4x32xbf16>
    %cst_13 = arith.constant dense<0.000000e+00> : vector<4x128xf32>
    %25 = tpu.matmul %24, %0, %cst_13 {dimension_numbers = #tpu.dot_dimension_numbers<[1], [0], [0], [1], [0, 0, 1, 1], [], []>} : vector<4x32xbf16>, vector<32x128xbf16>, vector<4x128xf32> -> vector<4x128xf32>
    %26 = vector.extract_strided_slice %20 {offsets = [0, 0], sizes = [4, 128], strides = [1, 1]} : vector<32x128xf32> to vector<4x128xf32>
    %27 = arith.addf %25, %26 : vector<4x128xf32>
    %28 = vector.extract_strided_slice %27 {offsets = [0, 0], sizes = [4, 96], strides = [1, 1]} : vector<4x128xf32> to vector<4x96xf32>
    %cst_14 = arith.constant 5.000000e-01 : f32
    %29 = vector.broadcast %cst_14 : f32 to vector<4x96xf32>
    %30 = arith.mulf %29, %28 : vector<4x96xf32>
    %31 = math.tanh %30 : vector<4x96xf32>
    %cst_15 = arith.constant 5.000000e-01 : f32
    %32 = vector.broadcast %cst_15 : f32 to vector<4x96xf32>
    %33 = arith.mulf %32, %31 : vector<4x96xf32>
    %cst_16 = arith.constant 5.000000e-01 : f32
    %34 = vector.broadcast %cst_16 : f32 to vector<4x96xf32>
    %35 = arith.addf %33, %34 : vector<4x96xf32>
    %36 = vector.extract_strided_slice %27 {offsets = [0, 96], sizes = [4, 32], strides = [1, 1]} : vector<4x128xf32> to vector<4x32xf32>
    %37 = math.tanh %36 : vector<4x32xf32>
    %38 = vector.extract_strided_slice %35 {offsets = [0, 0], sizes = [4, 32], strides = [1, 1]} : vector<4x96xf32> to vector<4x32xf32>
    %39 = vector.extract_strided_slice %35 {offsets = [0, 32], sizes = [4, 32], strides = [1, 1]} : vector<4x96xf32> to vector<4x32xf32>
    %40 = vector.extract_strided_slice %35 {offsets = [0, 64], sizes = [4, 32], strides = [1, 1]} : vector<4x96xf32> to vector<4x32xf32>
    %41 = arith.mulf %39, %21 : vector<4x32xf32>
    %42 = arith.mulf %38, %37 : vector<4x32xf32>
    %43 = arith.addf %41, %42 : vector<4x32xf32>
    %44 = math.tanh %43 : vector<4x32xf32>
    %45 = arith.mulf %40, %44 : vector<4x32xf32>
    %46 = arith.truncf %45 : vector<4x32xf32> to vector<4x32xbf16>
    %cst_17 = arith.constant dense<0.000000e+00> : vector<4x128xf32>
    %47 = tpu.matmul %46, %1, %cst_17 {dimension_numbers = #tpu.dot_dimension_numbers<[1], [0], [0], [1], [0, 0, 1, 1], [], []>} : vector<4x32xbf16>, vector<32x128xbf16>, vector<4x128xf32> -> vector<4x128xf32>
    %48 = arith.addf %47, %23 : vector<4x128xf32>
    %49 = arith.addf %48, %5 : vector<4x128xf32>
    %50 = vector.extract_strided_slice %49 {offsets = [0, 0], sizes = [4, 96], strides = [1, 1]} : vector<4x128xf32> to vector<4x96xf32>
    %cst_18 = arith.constant 5.000000e-01 : f32
    %51 = vector.broadcast %cst_18 : f32 to vector<4x96xf32>
    %52 = arith.mulf %51, %50 : vector<4x96xf32>
    %53 = math.tanh %52 : vector<4x96xf32>
    %cst_19 = arith.constant 5.000000e-01 : f32
    %54 = vector.broadcast %cst_19 : f32 to vector<4x96xf32>
    %55 = arith.mulf %54, %53 : vector<4x96xf32>
    %cst_20 = arith.constant 5.000000e-01 : f32
    %56 = vector.broadcast %cst_20 : f32 to vector<4x96xf32>
    %57 = arith.addf %55, %56 : vector<4x96xf32>
    %58 = vector.extract_strided_slice %49 {offsets = [0, 96], sizes = [4, 32], strides = [1, 1]} : vector<4x128xf32> to vector<4x32xf32>
    %59 = math.tanh %58 : vector<4x32xf32>
    %60 = vector.extract_strided_slice %57 {offsets = [0, 0], sizes = [4, 32], strides = [1, 1]} : vector<4x96xf32> to vector<4x32xf32>
    %61 = vector.extract_strided_slice %57 {offsets = [0, 32], sizes = [4, 32], strides = [1, 1]} : vector<4x96xf32> to vector<4x32xf32>
    %62 = vector.extract_strided_slice %57 {offsets = [0, 64], sizes = [4, 32], strides = [1, 1]} : vector<4x96xf32> to vector<4x32xf32>
    %63 = arith.mulf %61, %21 : vector<4x32xf32>
    %64 = arith.mulf %60, %59 : vector<4x32xf32>
    %65 = arith.addf %63, %64 : vector<4x32xf32>
    %66 = math.tanh %65 : vector<4x32xf32>
    %67 = arith.mulf %62, %66 : vector<4x32xf32>
    %68 = arith.truncf %67 : vector<4x32xf32> to vector<4x32xbf16>
    %cst_21 = arith.constant dense<0.000000e+00> : vector<4x128xf32>
    %69 = tpu.matmul %68, %2, %cst_21 {dimension_numbers = #tpu.dot_dimension_numbers<[1], [0], [0], [1], [0, 0, 1, 1], [], []>} : vector<4x32xbf16>, vector<32x128xbf16>, vector<4x128xf32> -> vector<4x128xf32>
    %70 = arith.truncf %45 : vector<4x32xf32> to vector<4x32xbf16>
    %cst_22 = arith.constant dense<0.000000e+00> : vector<4x128xf32>
    %71 = tpu.matmul %70, %0, %cst_22 {dimension_numbers = #tpu.dot_dimension_numbers<[1], [0], [0], [1], [0, 0, 1, 1], [], []>} : vector<4x32xbf16>, vector<32x128xbf16>, vector<4x128xf32> -> vector<4x128xf32>
    %72 = vector.extract_strided_slice %20 {offsets = [4, 0], sizes = [4, 128], strides = [1, 1]} : vector<32x128xf32> to vector<4x128xf32>
    %73 = arith.addf %71, %72 : vector<4x128xf32>
    %74 = vector.extract_strided_slice %73 {offsets = [0, 0], sizes = [4, 96], strides = [1, 1]} : vector<4x128xf32> to vector<4x96xf32>
    %cst_23 = arith.constant 5.000000e-01 : f32
    %75 = vector.broadcast %cst_23 : f32 to vector<4x96xf32>
    %76 = arith.mulf %75, %74 : vector<4x96xf32>
    %77 = math.tanh %76 : vector<4x96xf32>
    %cst_24 = arith.constant 5.000000e-01 : f32
    %78 = vector.broadcast %cst_24 : f32 to vector<4x96xf32>
    %79 = arith.mulf %78, %77 : vector<4x96xf32>
    %cst_25 = arith.constant 5.000000e-01 : f32
    %80 = vector.broadcast %cst_25 : f32 to vector<4x96xf32>
    %81 = arith.addf %79, %80 : vector<4x96xf32>
    %82 = vector.extract_strided_slice %73 {offsets = [0, 96], sizes = [4, 32], strides = [1, 1]} : vector<4x128xf32> to vector<4x32xf32>
    %83 = math.tanh %82 : vector<4x32xf32>
    %84 = vector.extract_strided_slice %81 {offsets = [0, 0], sizes = [4, 32], strides = [1, 1]} : vector<4x96xf32> to vector<4x32xf32>
    %85 = vector.extract_strided_slice %81 {offsets = [0, 32], sizes = [4, 32], strides = [1, 1]} : vector<4x96xf32> to vector<4x32xf32>
    %86 = vector.extract_strided_slice %81 {offsets = [0, 64], sizes = [4, 32], strides = [1, 1]} : vector<4x96xf32> to vector<4x32xf32>
    %87 = arith.mulf %85, %43 : vector<4x32xf32>
    %88 = arith.mulf %84, %83 : vector<4x32xf32>
    %89 = arith.addf %87, %88 : vector<4x32xf32>
    %90 = math.tanh %89 : vector<4x32xf32>
    %91 = arith.mulf %86, %90 : vector<4x32xf32>
    %92 = arith.truncf %91 : vector<4x32xf32> to vector<4x32xbf16>
    %cst_26 = arith.constant dense<0.000000e+00> : vector<4x128xf32>
    %93 = tpu.matmul %92, %1, %cst_26 {dimension_numbers = #tpu.dot_dimension_numbers<[1], [0], [0], [1], [0, 0, 1, 1], [], []>} : vector<4x32xbf16>, vector<32x128xbf16>, vector<4x128xf32> -> vector<4x128xf32>
    %94 = arith.addf %93, %69 : vector<4x128xf32>
    %95 = arith.addf %94, %5 : vector<4x128xf32>
    %96 = vector.extract_strided_slice %95 {offsets = [0, 0], sizes = [4, 96], strides = [1, 1]} : vector<4x128xf32> to vector<4x96xf32>
    %cst_27 = arith.constant 5.000000e-01 : f32
    %97 = vector.broadcast %cst_27 : f32 to vector<4x96xf32>
    %98 = arith.mulf %97, %96 : vector<4x96xf32>
    %99 = math.tanh %98 : vector<4x96xf32>
    %cst_28 = arith.constant 5.000000e-01 : f32
    %100 = vector.broadcast %cst_28 : f32 to vector<4x96xf32>
    %101 = arith.mulf %100, %99 : vector<4x96xf32>
    %cst_29 = arith.constant 5.000000e-01 : f32
    %102 = vector.broadcast %cst_29 : f32 to vector<4x96xf32>
    %103 = arith.addf %101, %102 : vector<4x96xf32>
    %104 = vector.extract_strided_slice %95 {offsets = [0, 96], sizes = [4, 32], strides = [1, 1]} : vector<4x128xf32> to vector<4x32xf32>
    %105 = math.tanh %104 : vector<4x32xf32>
    %106 = vector.extract_strided_slice %103 {offsets = [0, 0], sizes = [4, 32], strides = [1, 1]} : vector<4x96xf32> to vector<4x32xf32>
    %107 = vector.extract_strided_slice %103 {offsets = [0, 32], sizes = [4, 32], strides = [1, 1]} : vector<4x96xf32> to vector<4x32xf32>
    %108 = vector.extract_strided_slice %103 {offsets = [0, 64], sizes = [4, 32], strides = [1, 1]} : vector<4x96xf32> to vector<4x32xf32>
    %109 = arith.mulf %107, %65 : vector<4x32xf32>
    %110 = arith.mulf %106, %105 : vector<4x32xf32>
    %111 = arith.addf %109, %110 : vector<4x32xf32>
    %112 = math.tanh %111 : vector<4x32xf32>
    %113 = arith.mulf %108, %112 : vector<4x32xf32>
    %114 = arith.truncf %113 : vector<4x32xf32> to vector<4x32xbf16>
    %cst_30 = arith.constant dense<0.000000e+00> : vector<4x128xf32>
    %115 = tpu.matmul %114, %2, %cst_30 {dimension_numbers = #tpu.dot_dimension_numbers<[1], [0], [0], [1], [0, 0, 1, 1], [], []>} : vector<4x32xbf16>, vector<32x128xbf16>, vector<4x128xf32> -> vector<4x128xf32>
    %116 = arith.truncf %91 : vector<4x32xf32> to vector<4x32xbf16>
    %cst_31 = arith.constant dense<0.000000e+00> : vector<4x128xf32>
    %117 = tpu.matmul %116, %0, %cst_31 {dimension_numbers = #tpu.dot_dimension_numbers<[1], [0], [0], [1], [0, 0, 1, 1], [], []>} : vector<4x32xbf16>, vector<32x128xbf16>, vector<4x128xf32> -> vector<4x128xf32>
    %118 = vector.extract_strided_slice %20 {offsets = [8, 0], sizes = [4, 128], strides = [1, 1]} : vector<32x128xf32> to vector<4x128xf32>
    %119 = arith.addf %117, %118 : vector<4x128xf32>
    %120 = vector.extract_strided_slice %119 {offsets = [0, 0], sizes = [4, 96], strides = [1, 1]} : vector<4x128xf32> to vector<4x96xf32>
    %cst_32 = arith.constant 5.000000e-01 : f32
    %121 = vector.broadcast %cst_32 : f32 to vector<4x96xf32>
    %122 = arith.mulf %121, %120 : vector<4x96xf32>
    %123 = math.tanh %122 : vector<4x96xf32>
    %cst_33 = arith.constant 5.000000e-01 : f32
    %124 = vector.broadcast %cst_33 : f32 to vector<4x96xf32>
    %125 = arith.mulf %124, %123 : vector<4x96xf32>
    %cst_34 = arith.constant 5.000000e-01 : f32
    %126 = vector.broadcast %cst_34 : f32 to vector<4x96xf32>
    %127 = arith.addf %125, %126 : vector<4x96xf32>
    %128 = vector.extract_strided_slice %119 {offsets = [0, 96], sizes = [4, 32], strides = [1, 1]} : vector<4x128xf32> to vector<4x32xf32>
    %129 = math.tanh %128 : vector<4x32xf32>
    %130 = vector.extract_strided_slice %127 {offsets = [0, 0], sizes = [4, 32], strides = [1, 1]} : vector<4x96xf32> to vector<4x32xf32>
    %131 = vector.extract_strided_slice %127 {offsets = [0, 32], sizes = [4, 32], strides = [1, 1]} : vector<4x96xf32> to vector<4x32xf32>
    %132 = vector.extract_strided_slice %127 {offsets = [0, 64], sizes = [4, 32], strides = [1, 1]} : vector<4x96xf32> to vector<4x32xf32>
    %133 = arith.mulf %131, %89 : vector<4x32xf32>
    %134 = arith.mulf %130, %129 : vector<4x32xf32>
    %135 = arith.addf %133, %134 : vector<4x32xf32>
    %136 = math.tanh %135 : vector<4x32xf32>
    %137 = arith.mulf %132, %136 : vector<4x32xf32>
    %138 = arith.truncf %137 : vector<4x32xf32> to vector<4x32xbf16>
    %cst_35 = arith.constant dense<0.000000e+00> : vector<4x128xf32>
    %139 = tpu.matmul %138, %1, %cst_35 {dimension_numbers = #tpu.dot_dimension_numbers<[1], [0], [0], [1], [0, 0, 1, 1], [], []>} : vector<4x32xbf16>, vector<32x128xbf16>, vector<4x128xf32> -> vector<4x128xf32>
    %140 = arith.addf %139, %115 : vector<4x128xf32>
    %141 = arith.addf %140, %5 : vector<4x128xf32>
    %142 = vector.extract_strided_slice %141 {offsets = [0, 0], sizes = [4, 96], strides = [1, 1]} : vector<4x128xf32> to vector<4x96xf32>
    %cst_36 = arith.constant 5.000000e-01 : f32
    %143 = vector.broadcast %cst_36 : f32 to vector<4x96xf32>
    %144 = arith.mulf %143, %142 : vector<4x96xf32>
    %145 = math.tanh %144 : vector<4x96xf32>
    %cst_37 = arith.constant 5.000000e-01 : f32
    %146 = vector.broadcast %cst_37 : f32 to vector<4x96xf32>
    %147 = arith.mulf %146, %145 : vector<4x96xf32>
    %cst_38 = arith.constant 5.000000e-01 : f32
    %148 = vector.broadcast %cst_38 : f32 to vector<4x96xf32>
    %149 = arith.addf %147, %148 : vector<4x96xf32>
    %150 = vector.extract_strided_slice %141 {offsets = [0, 96], sizes = [4, 32], strides = [1, 1]} : vector<4x128xf32> to vector<4x32xf32>
    %151 = math.tanh %150 : vector<4x32xf32>
    %152 = vector.extract_strided_slice %149 {offsets = [0, 0], sizes = [4, 32], strides = [1, 1]} : vector<4x96xf32> to vector<4x32xf32>
    %153 = vector.extract_strided_slice %149 {offsets = [0, 32], sizes = [4, 32], strides = [1, 1]} : vector<4x96xf32> to vector<4x32xf32>
    %154 = vector.extract_strided_slice %149 {offsets = [0, 64], sizes = [4, 32], strides = [1, 1]} : vector<4x96xf32> to vector<4x32xf32>
    %155 = arith.mulf %153, %111 : vector<4x32xf32>
    %156 = arith.mulf %152, %151 : vector<4x32xf32>
    %157 = arith.addf %155, %156 : vector<4x32xf32>
    %158 = math.tanh %157 : vector<4x32xf32>
    %159 = arith.mulf %154, %158 : vector<4x32xf32>
    %160 = arith.truncf %159 : vector<4x32xf32> to vector<4x32xbf16>
    %cst_39 = arith.constant dense<0.000000e+00> : vector<4x128xf32>
    %161 = tpu.matmul %160, %2, %cst_39 {dimension_numbers = #tpu.dot_dimension_numbers<[1], [0], [0], [1], [0, 0, 1, 1], [], []>} : vector<4x32xbf16>, vector<32x128xbf16>, vector<4x128xf32> -> vector<4x128xf32>
    %162 = arith.truncf %137 : vector<4x32xf32> to vector<4x32xbf16>
    %cst_40 = arith.constant dense<0.000000e+00> : vector<4x128xf32>
    %163 = tpu.matmul %162, %0, %cst_40 {dimension_numbers = #tpu.dot_dimension_numbers<[1], [0], [0], [1], [0, 0, 1, 1], [], []>} : vector<4x32xbf16>, vector<32x128xbf16>, vector<4x128xf32> -> vector<4x128xf32>
    %164 = vector.extract_strided_slice %20 {offsets = [12, 0], sizes = [4, 128], strides = [1, 1]} : vector<32x128xf32> to vector<4x128xf32>
    %165 = arith.addf %163, %164 : vector<4x128xf32>
    %166 = vector.extract_strided_slice %165 {offsets = [0, 0], sizes = [4, 96], strides = [1, 1]} : vector<4x128xf32> to vector<4x96xf32>
    %cst_41 = arith.constant 5.000000e-01 : f32
    %167 = vector.broadcast %cst_41 : f32 to vector<4x96xf32>
    %168 = arith.mulf %167, %166 : vector<4x96xf32>
    %169 = math.tanh %168 : vector<4x96xf32>
    %cst_42 = arith.constant 5.000000e-01 : f32
    %170 = vector.broadcast %cst_42 : f32 to vector<4x96xf32>
    %171 = arith.mulf %170, %169 : vector<4x96xf32>
    %cst_43 = arith.constant 5.000000e-01 : f32
    %172 = vector.broadcast %cst_43 : f32 to vector<4x96xf32>
    %173 = arith.addf %171, %172 : vector<4x96xf32>
    %174 = vector.extract_strided_slice %165 {offsets = [0, 96], sizes = [4, 32], strides = [1, 1]} : vector<4x128xf32> to vector<4x32xf32>
    %175 = math.tanh %174 : vector<4x32xf32>
    %176 = vector.extract_strided_slice %173 {offsets = [0, 0], sizes = [4, 32], strides = [1, 1]} : vector<4x96xf32> to vector<4x32xf32>
    %177 = vector.extract_strided_slice %173 {offsets = [0, 32], sizes = [4, 32], strides = [1, 1]} : vector<4x96xf32> to vector<4x32xf32>
    %178 = vector.extract_strided_slice %173 {offsets = [0, 64], sizes = [4, 32], strides = [1, 1]} : vector<4x96xf32> to vector<4x32xf32>
    %179 = arith.mulf %177, %135 : vector<4x32xf32>
    %180 = arith.mulf %176, %175 : vector<4x32xf32>
    %181 = arith.addf %179, %180 : vector<4x32xf32>
    %182 = math.tanh %181 : vector<4x32xf32>
    %183 = arith.mulf %178, %182 : vector<4x32xf32>
    %184 = arith.truncf %183 : vector<4x32xf32> to vector<4x32xbf16>
    %cst_44 = arith.constant dense<0.000000e+00> : vector<4x128xf32>
    %185 = tpu.matmul %184, %1, %cst_44 {dimension_numbers = #tpu.dot_dimension_numbers<[1], [0], [0], [1], [0, 0, 1, 1], [], []>} : vector<4x32xbf16>, vector<32x128xbf16>, vector<4x128xf32> -> vector<4x128xf32>
    %186 = arith.addf %185, %161 : vector<4x128xf32>
    %187 = arith.addf %186, %5 : vector<4x128xf32>
    %188 = vector.extract_strided_slice %187 {offsets = [0, 0], sizes = [4, 96], strides = [1, 1]} : vector<4x128xf32> to vector<4x96xf32>
    %cst_45 = arith.constant 5.000000e-01 : f32
    %189 = vector.broadcast %cst_45 : f32 to vector<4x96xf32>
    %190 = arith.mulf %189, %188 : vector<4x96xf32>
    %191 = math.tanh %190 : vector<4x96xf32>
    %cst_46 = arith.constant 5.000000e-01 : f32
    %192 = vector.broadcast %cst_46 : f32 to vector<4x96xf32>
    %193 = arith.mulf %192, %191 : vector<4x96xf32>
    %cst_47 = arith.constant 5.000000e-01 : f32
    %194 = vector.broadcast %cst_47 : f32 to vector<4x96xf32>
    %195 = arith.addf %193, %194 : vector<4x96xf32>
    %196 = vector.extract_strided_slice %187 {offsets = [0, 96], sizes = [4, 32], strides = [1, 1]} : vector<4x128xf32> to vector<4x32xf32>
    %197 = math.tanh %196 : vector<4x32xf32>
    %198 = vector.extract_strided_slice %195 {offsets = [0, 0], sizes = [4, 32], strides = [1, 1]} : vector<4x96xf32> to vector<4x32xf32>
    %199 = vector.extract_strided_slice %195 {offsets = [0, 32], sizes = [4, 32], strides = [1, 1]} : vector<4x96xf32> to vector<4x32xf32>
    %200 = vector.extract_strided_slice %195 {offsets = [0, 64], sizes = [4, 32], strides = [1, 1]} : vector<4x96xf32> to vector<4x32xf32>
    %201 = arith.mulf %199, %157 : vector<4x32xf32>
    %202 = arith.mulf %198, %197 : vector<4x32xf32>
    %203 = arith.addf %201, %202 : vector<4x32xf32>
    %204 = math.tanh %203 : vector<4x32xf32>
    %205 = arith.mulf %200, %204 : vector<4x32xf32>
    %206 = arith.truncf %205 : vector<4x32xf32> to vector<4x32xbf16>
    %cst_48 = arith.constant dense<0.000000e+00> : vector<4x128xf32>
    %207 = tpu.matmul %206, %2, %cst_48 {dimension_numbers = #tpu.dot_dimension_numbers<[1], [0], [0], [1], [0, 0, 1, 1], [], []>} : vector<4x32xbf16>, vector<32x128xbf16>, vector<4x128xf32> -> vector<4x128xf32>
    %208 = arith.truncf %183 : vector<4x32xf32> to vector<4x32xbf16>
    %cst_49 = arith.constant dense<0.000000e+00> : vector<4x128xf32>
    %209 = tpu.matmul %208, %0, %cst_49 {dimension_numbers = #tpu.dot_dimension_numbers<[1], [0], [0], [1], [0, 0, 1, 1], [], []>} : vector<4x32xbf16>, vector<32x128xbf16>, vector<4x128xf32> -> vector<4x128xf32>
    %210 = vector.extract_strided_slice %20 {offsets = [16, 0], sizes = [4, 128], strides = [1, 1]} : vector<32x128xf32> to vector<4x128xf32>
    %211 = arith.addf %209, %210 : vector<4x128xf32>
    %212 = vector.extract_strided_slice %211 {offsets = [0, 0], sizes = [4, 96], strides = [1, 1]} : vector<4x128xf32> to vector<4x96xf32>
    %cst_50 = arith.constant 5.000000e-01 : f32
    %213 = vector.broadcast %cst_50 : f32 to vector<4x96xf32>
    %214 = arith.mulf %213, %212 : vector<4x96xf32>
    %215 = math.tanh %214 : vector<4x96xf32>
    %cst_51 = arith.constant 5.000000e-01 : f32
    %216 = vector.broadcast %cst_51 : f32 to vector<4x96xf32>
    %217 = arith.mulf %216, %215 : vector<4x96xf32>
    %cst_52 = arith.constant 5.000000e-01 : f32
    %218 = vector.broadcast %cst_52 : f32 to vector<4x96xf32>
    %219 = arith.addf %217, %218 : vector<4x96xf32>
    %220 = vector.extract_strided_slice %211 {offsets = [0, 96], sizes = [4, 32], strides = [1, 1]} : vector<4x128xf32> to vector<4x32xf32>
    %221 = math.tanh %220 : vector<4x32xf32>
    %222 = vector.extract_strided_slice %219 {offsets = [0, 0], sizes = [4, 32], strides = [1, 1]} : vector<4x96xf32> to vector<4x32xf32>
    %223 = vector.extract_strided_slice %219 {offsets = [0, 32], sizes = [4, 32], strides = [1, 1]} : vector<4x96xf32> to vector<4x32xf32>
    %224 = vector.extract_strided_slice %219 {offsets = [0, 64], sizes = [4, 32], strides = [1, 1]} : vector<4x96xf32> to vector<4x32xf32>
    %225 = arith.mulf %223, %181 : vector<4x32xf32>
    %226 = arith.mulf %222, %221 : vector<4x32xf32>
    %227 = arith.addf %225, %226 : vector<4x32xf32>
    %228 = math.tanh %227 : vector<4x32xf32>
    %229 = arith.mulf %224, %228 : vector<4x32xf32>
    %230 = arith.truncf %229 : vector<4x32xf32> to vector<4x32xbf16>
    %cst_53 = arith.constant dense<0.000000e+00> : vector<4x128xf32>
    %231 = tpu.matmul %230, %1, %cst_53 {dimension_numbers = #tpu.dot_dimension_numbers<[1], [0], [0], [1], [0, 0, 1, 1], [], []>} : vector<4x32xbf16>, vector<32x128xbf16>, vector<4x128xf32> -> vector<4x128xf32>
    %232 = arith.addf %231, %207 : vector<4x128xf32>
    %233 = arith.addf %232, %5 : vector<4x128xf32>
    %234 = vector.extract_strided_slice %233 {offsets = [0, 0], sizes = [4, 96], strides = [1, 1]} : vector<4x128xf32> to vector<4x96xf32>
    %cst_54 = arith.constant 5.000000e-01 : f32
    %235 = vector.broadcast %cst_54 : f32 to vector<4x96xf32>
    %236 = arith.mulf %235, %234 : vector<4x96xf32>
    %237 = math.tanh %236 : vector<4x96xf32>
    %cst_55 = arith.constant 5.000000e-01 : f32
    %238 = vector.broadcast %cst_55 : f32 to vector<4x96xf32>
    %239 = arith.mulf %238, %237 : vector<4x96xf32>
    %cst_56 = arith.constant 5.000000e-01 : f32
    %240 = vector.broadcast %cst_56 : f32 to vector<4x96xf32>
    %241 = arith.addf %239, %240 : vector<4x96xf32>
    %242 = vector.extract_strided_slice %233 {offsets = [0, 96], sizes = [4, 32], strides = [1, 1]} : vector<4x128xf32> to vector<4x32xf32>
    %243 = math.tanh %242 : vector<4x32xf32>
    %244 = vector.extract_strided_slice %241 {offsets = [0, 0], sizes = [4, 32], strides = [1, 1]} : vector<4x96xf32> to vector<4x32xf32>
    %245 = vector.extract_strided_slice %241 {offsets = [0, 32], sizes = [4, 32], strides = [1, 1]} : vector<4x96xf32> to vector<4x32xf32>
    %246 = vector.extract_strided_slice %241 {offsets = [0, 64], sizes = [4, 32], strides = [1, 1]} : vector<4x96xf32> to vector<4x32xf32>
    %247 = arith.mulf %245, %203 : vector<4x32xf32>
    %248 = arith.mulf %244, %243 : vector<4x32xf32>
    %249 = arith.addf %247, %248 : vector<4x32xf32>
    %250 = math.tanh %249 : vector<4x32xf32>
    %251 = arith.mulf %246, %250 : vector<4x32xf32>
    %252 = arith.truncf %251 : vector<4x32xf32> to vector<4x32xbf16>
    %cst_57 = arith.constant dense<0.000000e+00> : vector<4x128xf32>
    %253 = tpu.matmul %252, %2, %cst_57 {dimension_numbers = #tpu.dot_dimension_numbers<[1], [0], [0], [1], [0, 0, 1, 1], [], []>} : vector<4x32xbf16>, vector<32x128xbf16>, vector<4x128xf32> -> vector<4x128xf32>
    %254 = arith.truncf %229 : vector<4x32xf32> to vector<4x32xbf16>
    %cst_58 = arith.constant dense<0.000000e+00> : vector<4x128xf32>
    %255 = tpu.matmul %254, %0, %cst_58 {dimension_numbers = #tpu.dot_dimension_numbers<[1], [0], [0], [1], [0, 0, 1, 1], [], []>} : vector<4x32xbf16>, vector<32x128xbf16>, vector<4x128xf32> -> vector<4x128xf32>
    %256 = vector.extract_strided_slice %20 {offsets = [20, 0], sizes = [4, 128], strides = [1, 1]} : vector<32x128xf32> to vector<4x128xf32>
    %257 = arith.addf %255, %256 : vector<4x128xf32>
    %258 = vector.extract_strided_slice %257 {offsets = [0, 0], sizes = [4, 96], strides = [1, 1]} : vector<4x128xf32> to vector<4x96xf32>
    %cst_59 = arith.constant 5.000000e-01 : f32
    %259 = vector.broadcast %cst_59 : f32 to vector<4x96xf32>
    %260 = arith.mulf %259, %258 : vector<4x96xf32>
    %261 = math.tanh %260 : vector<4x96xf32>
    %cst_60 = arith.constant 5.000000e-01 : f32
    %262 = vector.broadcast %cst_60 : f32 to vector<4x96xf32>
    %263 = arith.mulf %262, %261 : vector<4x96xf32>
    %cst_61 = arith.constant 5.000000e-01 : f32
    %264 = vector.broadcast %cst_61 : f32 to vector<4x96xf32>
    %265 = arith.addf %263, %264 : vector<4x96xf32>
    %266 = vector.extract_strided_slice %257 {offsets = [0, 96], sizes = [4, 32], strides = [1, 1]} : vector<4x128xf32> to vector<4x32xf32>
    %267 = math.tanh %266 : vector<4x32xf32>
    %268 = vector.extract_strided_slice %265 {offsets = [0, 0], sizes = [4, 32], strides = [1, 1]} : vector<4x96xf32> to vector<4x32xf32>
    %269 = vector.extract_strided_slice %265 {offsets = [0, 32], sizes = [4, 32], strides = [1, 1]} : vector<4x96xf32> to vector<4x32xf32>
    %270 = vector.extract_strided_slice %265 {offsets = [0, 64], sizes = [4, 32], strides = [1, 1]} : vector<4x96xf32> to vector<4x32xf32>
    %271 = arith.mulf %269, %227 : vector<4x32xf32>
    %272 = arith.mulf %268, %267 : vector<4x32xf32>
    %273 = arith.addf %271, %272 : vector<4x32xf32>
    %274 = math.tanh %273 : vector<4x32xf32>
    %275 = arith.mulf %270, %274 : vector<4x32xf32>
    %276 = arith.truncf %275 : vector<4x32xf32> to vector<4x32xbf16>
    %cst_62 = arith.constant dense<0.000000e+00> : vector<4x128xf32>
    %277 = tpu.matmul %276, %1, %cst_62 {dimension_numbers = #tpu.dot_dimension_numbers<[1], [0], [0], [1], [0, 0, 1, 1], [], []>} : vector<4x32xbf16>, vector<32x128xbf16>, vector<4x128xf32> -> vector<4x128xf32>
    %278 = arith.addf %277, %253 : vector<4x128xf32>
    %279 = arith.addf %278, %5 : vector<4x128xf32>
    %280 = vector.extract_strided_slice %279 {offsets = [0, 0], sizes = [4, 96], strides = [1, 1]} : vector<4x128xf32> to vector<4x96xf32>
    %cst_63 = arith.constant 5.000000e-01 : f32
    %281 = vector.broadcast %cst_63 : f32 to vector<4x96xf32>
    %282 = arith.mulf %281, %280 : vector<4x96xf32>
    %283 = math.tanh %282 : vector<4x96xf32>
    %cst_64 = arith.constant 5.000000e-01 : f32
    %284 = vector.broadcast %cst_64 : f32 to vector<4x96xf32>
    %285 = arith.mulf %284, %283 : vector<4x96xf32>
    %cst_65 = arith.constant 5.000000e-01 : f32
    %286 = vector.broadcast %cst_65 : f32 to vector<4x96xf32>
    %287 = arith.addf %285, %286 : vector<4x96xf32>
    %288 = vector.extract_strided_slice %279 {offsets = [0, 96], sizes = [4, 32], strides = [1, 1]} : vector<4x128xf32> to vector<4x32xf32>
    %289 = math.tanh %288 : vector<4x32xf32>
    %290 = vector.extract_strided_slice %287 {offsets = [0, 0], sizes = [4, 32], strides = [1, 1]} : vector<4x96xf32> to vector<4x32xf32>
    %291 = vector.extract_strided_slice %287 {offsets = [0, 32], sizes = [4, 32], strides = [1, 1]} : vector<4x96xf32> to vector<4x32xf32>
    %292 = vector.extract_strided_slice %287 {offsets = [0, 64], sizes = [4, 32], strides = [1, 1]} : vector<4x96xf32> to vector<4x32xf32>
    %293 = arith.mulf %291, %249 : vector<4x32xf32>
    %294 = arith.mulf %290, %289 : vector<4x32xf32>
    %295 = arith.addf %293, %294 : vector<4x32xf32>
    %296 = math.tanh %295 : vector<4x32xf32>
    %297 = arith.mulf %292, %296 : vector<4x32xf32>
    %298 = arith.truncf %297 : vector<4x32xf32> to vector<4x32xbf16>
    %cst_66 = arith.constant dense<0.000000e+00> : vector<4x128xf32>
    %299 = tpu.matmul %298, %2, %cst_66 {dimension_numbers = #tpu.dot_dimension_numbers<[1], [0], [0], [1], [0, 0, 1, 1], [], []>} : vector<4x32xbf16>, vector<32x128xbf16>, vector<4x128xf32> -> vector<4x128xf32>
    %300 = arith.truncf %275 : vector<4x32xf32> to vector<4x32xbf16>
    %cst_67 = arith.constant dense<0.000000e+00> : vector<4x128xf32>
    %301 = tpu.matmul %300, %0, %cst_67 {dimension_numbers = #tpu.dot_dimension_numbers<[1], [0], [0], [1], [0, 0, 1, 1], [], []>} : vector<4x32xbf16>, vector<32x128xbf16>, vector<4x128xf32> -> vector<4x128xf32>
    %302 = vector.extract_strided_slice %20 {offsets = [24, 0], sizes = [4, 128], strides = [1, 1]} : vector<32x128xf32> to vector<4x128xf32>
    %303 = arith.addf %301, %302 : vector<4x128xf32>
    %304 = vector.extract_strided_slice %303 {offsets = [0, 0], sizes = [4, 96], strides = [1, 1]} : vector<4x128xf32> to vector<4x96xf32>
    %cst_68 = arith.constant 5.000000e-01 : f32
    %305 = vector.broadcast %cst_68 : f32 to vector<4x96xf32>
    %306 = arith.mulf %305, %304 : vector<4x96xf32>
    %307 = math.tanh %306 : vector<4x96xf32>
    %cst_69 = arith.constant 5.000000e-01 : f32
    %308 = vector.broadcast %cst_69 : f32 to vector<4x96xf32>
    %309 = arith.mulf %308, %307 : vector<4x96xf32>
    %cst_70 = arith.constant 5.000000e-01 : f32
    %310 = vector.broadcast %cst_70 : f32 to vector<4x96xf32>
    %311 = arith.addf %309, %310 : vector<4x96xf32>
    %312 = vector.extract_strided_slice %303 {offsets = [0, 96], sizes = [4, 32], strides = [1, 1]} : vector<4x128xf32> to vector<4x32xf32>
    %313 = math.tanh %312 : vector<4x32xf32>
    %314 = vector.extract_strided_slice %311 {offsets = [0, 0], sizes = [4, 32], strides = [1, 1]} : vector<4x96xf32> to vector<4x32xf32>
    %315 = vector.extract_strided_slice %311 {offsets = [0, 32], sizes = [4, 32], strides = [1, 1]} : vector<4x96xf32> to vector<4x32xf32>
    %316 = vector.extract_strided_slice %311 {offsets = [0, 64], sizes = [4, 32], strides = [1, 1]} : vector<4x96xf32> to vector<4x32xf32>
    %317 = arith.mulf %315, %273 : vector<4x32xf32>
    %318 = arith.mulf %314, %313 : vector<4x32xf32>
    %319 = arith.addf %317, %318 : vector<4x32xf32>
    %320 = math.tanh %319 : vector<4x32xf32>
    %321 = arith.mulf %316, %320 : vector<4x32xf32>
    %322 = arith.truncf %321 : vector<4x32xf32> to vector<4x32xbf16>
    %cst_71 = arith.constant dense<0.000000e+00> : vector<4x128xf32>
    %323 = tpu.matmul %322, %1, %cst_71 {dimension_numbers = #tpu.dot_dimension_numbers<[1], [0], [0], [1], [0, 0, 1, 1], [], []>} : vector<4x32xbf16>, vector<32x128xbf16>, vector<4x128xf32> -> vector<4x128xf32>
    %324 = arith.addf %323, %299 : vector<4x128xf32>
    %325 = arith.addf %324, %5 : vector<4x128xf32>
    %326 = vector.extract_strided_slice %325 {offsets = [0, 0], sizes = [4, 96], strides = [1, 1]} : vector<4x128xf32> to vector<4x96xf32>
    %cst_72 = arith.constant 5.000000e-01 : f32
    %327 = vector.broadcast %cst_72 : f32 to vector<4x96xf32>
    %328 = arith.mulf %327, %326 : vector<4x96xf32>
    %329 = math.tanh %328 : vector<4x96xf32>
    %cst_73 = arith.constant 5.000000e-01 : f32
    %330 = vector.broadcast %cst_73 : f32 to vector<4x96xf32>
    %331 = arith.mulf %330, %329 : vector<4x96xf32>
    %cst_74 = arith.constant 5.000000e-01 : f32
    %332 = vector.broadcast %cst_74 : f32 to vector<4x96xf32>
    %333 = arith.addf %331, %332 : vector<4x96xf32>
    %334 = vector.extract_strided_slice %325 {offsets = [0, 96], sizes = [4, 32], strides = [1, 1]} : vector<4x128xf32> to vector<4x32xf32>
    %335 = math.tanh %334 : vector<4x32xf32>
    %336 = vector.extract_strided_slice %333 {offsets = [0, 0], sizes = [4, 32], strides = [1, 1]} : vector<4x96xf32> to vector<4x32xf32>
    %337 = vector.extract_strided_slice %333 {offsets = [0, 32], sizes = [4, 32], strides = [1, 1]} : vector<4x96xf32> to vector<4x32xf32>
    %338 = vector.extract_strided_slice %333 {offsets = [0, 64], sizes = [4, 32], strides = [1, 1]} : vector<4x96xf32> to vector<4x32xf32>
    %339 = arith.mulf %337, %295 : vector<4x32xf32>
    %340 = arith.mulf %336, %335 : vector<4x32xf32>
    %341 = arith.addf %339, %340 : vector<4x32xf32>
    %342 = math.tanh %341 : vector<4x32xf32>
    %343 = arith.mulf %338, %342 : vector<4x32xf32>
    %344 = arith.truncf %343 : vector<4x32xf32> to vector<4x32xbf16>
    %cst_75 = arith.constant dense<0.000000e+00> : vector<4x128xf32>
    %345 = tpu.matmul %344, %2, %cst_75 {dimension_numbers = #tpu.dot_dimension_numbers<[1], [0], [0], [1], [0, 0, 1, 1], [], []>} : vector<4x32xbf16>, vector<32x128xbf16>, vector<4x128xf32> -> vector<4x128xf32>
    %346 = arith.truncf %321 : vector<4x32xf32> to vector<4x32xbf16>
    %cst_76 = arith.constant dense<0.000000e+00> : vector<4x128xf32>
    %347 = tpu.matmul %346, %0, %cst_76 {dimension_numbers = #tpu.dot_dimension_numbers<[1], [0], [0], [1], [0, 0, 1, 1], [], []>} : vector<4x32xbf16>, vector<32x128xbf16>, vector<4x128xf32> -> vector<4x128xf32>
    %348 = vector.extract_strided_slice %20 {offsets = [28, 0], sizes = [4, 128], strides = [1, 1]} : vector<32x128xf32> to vector<4x128xf32>
    %349 = arith.addf %347, %348 : vector<4x128xf32>
    %350 = vector.extract_strided_slice %349 {offsets = [0, 0], sizes = [4, 96], strides = [1, 1]} : vector<4x128xf32> to vector<4x96xf32>
    %cst_77 = arith.constant 5.000000e-01 : f32
    %351 = vector.broadcast %cst_77 : f32 to vector<4x96xf32>
    %352 = arith.mulf %351, %350 : vector<4x96xf32>
    %353 = math.tanh %352 : vector<4x96xf32>
    %cst_78 = arith.constant 5.000000e-01 : f32
    %354 = vector.broadcast %cst_78 : f32 to vector<4x96xf32>
    %355 = arith.mulf %354, %353 : vector<4x96xf32>
    %cst_79 = arith.constant 5.000000e-01 : f32
    %356 = vector.broadcast %cst_79 : f32 to vector<4x96xf32>
    %357 = arith.addf %355, %356 : vector<4x96xf32>
    %358 = vector.extract_strided_slice %349 {offsets = [0, 96], sizes = [4, 32], strides = [1, 1]} : vector<4x128xf32> to vector<4x32xf32>
    %359 = math.tanh %358 : vector<4x32xf32>
    %360 = vector.extract_strided_slice %357 {offsets = [0, 0], sizes = [4, 32], strides = [1, 1]} : vector<4x96xf32> to vector<4x32xf32>
    %361 = vector.extract_strided_slice %357 {offsets = [0, 32], sizes = [4, 32], strides = [1, 1]} : vector<4x96xf32> to vector<4x32xf32>
    %362 = vector.extract_strided_slice %357 {offsets = [0, 64], sizes = [4, 32], strides = [1, 1]} : vector<4x96xf32> to vector<4x32xf32>
    %363 = arith.mulf %361, %319 : vector<4x32xf32>
    %364 = arith.mulf %360, %359 : vector<4x32xf32>
    %365 = arith.addf %363, %364 : vector<4x32xf32>
    %366 = math.tanh %365 : vector<4x32xf32>
    %367 = arith.mulf %362, %366 : vector<4x32xf32>
    %368 = arith.truncf %367 : vector<4x32xf32> to vector<4x32xbf16>
    %cst_80 = arith.constant dense<0.000000e+00> : vector<4x128xf32>
    %369 = tpu.matmul %368, %1, %cst_80 {dimension_numbers = #tpu.dot_dimension_numbers<[1], [0], [0], [1], [0, 0, 1, 1], [], []>} : vector<4x32xbf16>, vector<32x128xbf16>, vector<4x128xf32> -> vector<4x128xf32>
    %370 = arith.addf %369, %345 : vector<4x128xf32>
    %371 = arith.addf %370, %5 : vector<4x128xf32>
    %372 = vector.extract_strided_slice %371 {offsets = [0, 0], sizes = [4, 96], strides = [1, 1]} : vector<4x128xf32> to vector<4x96xf32>
    %cst_81 = arith.constant 5.000000e-01 : f32
    %373 = vector.broadcast %cst_81 : f32 to vector<4x96xf32>
    %374 = arith.mulf %373, %372 : vector<4x96xf32>
    %375 = math.tanh %374 : vector<4x96xf32>
    %cst_82 = arith.constant 5.000000e-01 : f32
    %376 = vector.broadcast %cst_82 : f32 to vector<4x96xf32>
    %377 = arith.mulf %376, %375 : vector<4x96xf32>
    %cst_83 = arith.constant 5.000000e-01 : f32
    %378 = vector.broadcast %cst_83 : f32 to vector<4x96xf32>
    %379 = arith.addf %377, %378 : vector<4x96xf32>
    %380 = vector.extract_strided_slice %371 {offsets = [0, 96], sizes = [4, 32], strides = [1, 1]} : vector<4x128xf32> to vector<4x32xf32>
    %381 = math.tanh %380 : vector<4x32xf32>
    %382 = vector.extract_strided_slice %379 {offsets = [0, 0], sizes = [4, 32], strides = [1, 1]} : vector<4x96xf32> to vector<4x32xf32>
    %383 = vector.extract_strided_slice %379 {offsets = [0, 32], sizes = [4, 32], strides = [1, 1]} : vector<4x96xf32> to vector<4x32xf32>
    %384 = vector.extract_strided_slice %379 {offsets = [0, 64], sizes = [4, 32], strides = [1, 1]} : vector<4x96xf32> to vector<4x32xf32>
    %385 = arith.mulf %383, %341 : vector<4x32xf32>
    %386 = arith.mulf %382, %381 : vector<4x32xf32>
    %387 = arith.addf %385, %386 : vector<4x32xf32>
    %388 = math.tanh %387 : vector<4x32xf32>
    %389 = arith.mulf %384, %388 : vector<4x32xf32>
    %c4 = arith.constant 4 : index
    %c0_84 = arith.constant 0 : index
    %390 = vector.load %arg2[%c4, %c0_84] : memref<6x128xf32, #tpu.memory_space<vmem>>, vector<1x32xf32>
    %c5 = arith.constant 5 : index
    %c0_85 = arith.constant 0 : index
    %391 = vector.load %arg2[%c5, %c0_85] : memref<6x128xf32, #tpu.memory_space<vmem>>, vector<1x1xf32>
    %392 = vector.broadcast %390 : vector<1x32xf32> to vector<4x32xf32>
    %393 = arith.mulf %389, %392 : vector<4x32xf32>
    %cst_86 = arith.constant dense<0.000000e+00> : vector<4xf32>
    %394 = vector.multi_reduction <add>, %393, %cst_86 [1] : vector<4x32xf32> to vector<4xf32>
    %395 = vector.shape_cast %394 : vector<4xf32> to vector<4x1xf32>
    %396 = vector.broadcast %391 : vector<1x1xf32> to vector<4x1xf32>
    %397 = arith.addf %395, %396 : vector<4x1xf32>
    %c0_87 = arith.constant 0 : index
    %c0_88 = arith.constant 0 : index
    %398 = vector.load %arg3[%c0_87, %c0_88] : memref<4x1xf32, #tpu.memory_space<vmem>>, vector<4x1xf32>
    tpu.vector_store %arg3[%c0_87, %c0_88], %397 {strides = array<i32>} : memref<4x1xf32, #tpu.memory_space<vmem>>, vector<4x1xf32>,
    return
  }
}

</mosaic_0001>

<llo_original>
// kernel: discriminator_forward.1
$region0: #{discriminator_forward.1}
  #allocation0 [shape = 'u32[]', space=smem, size = 0x4, offset = 0x4, fixed_abs, tag = 'smem constant byte address 0x4 - core index']
  #allocation1 [shape = 'u32[144,128]{1,0:T(1,128)}', space=vmem, size = 0x12000, scoped, tag = 'internal scratch']
  %s0 = inlined_call_operand.vmem [shape: f32[32,2], index: 0, kind: input, shape index: {}]
  %s1 = inlined_call_operand.hbm [shape: bf16[96,128], index: 1, kind: input, shape index: {}]
  %s2 = inlined_call_operand.vmem [shape: f32[6,128], index: 2, kind: input, shape index: {}]
  %s3 = inlined_call_operand.vmem [shape: f32[4,1], index: 3, kind: output, shape index: {}]
  %s4 = sld [smem:[#allocation0]]
  $region26: #{discriminator_forward.1} parent=0
    _
  %s6 = ssub.s32 1, %s4
  %s7 = scalar_select 0, %s6, %s4
  $region1: #{discriminator_forward.1} parent=0
    #allocation2 [shape = 'u8[24576]{0}', space=vmem, size = 0x6000, scoped, tag = 'input window, operand 1, single buffered']
    #allocation3 [shape = 's32[1]{0}', space=sflag, size = 0x4, scoped, tag = 'scoped memory for discriminator_forward.1']
    %8 = vsyncpa [#allocation3], 0
    // Predicated region
    $region2: #{discriminator_forward.1} parent=1 // pred_check
      _
    $region3: #{discriminator_forward.1} parent=1 // pred_check_branch
      %10 = sbr.rel (0) target = $region5
    $region4: #{discriminator_forward.1} parent=1 // pred_region
      _
    $region5: #{discriminator_forward.1} parent=1 // pred_fallthru
      _
    // Predicated region
    $region6: #{discriminator_forward.1} parent=1 // pred_check
      _
    $region7: #{discriminator_forward.1} parent=1 // pred_check_branch
      %12 = sbr.rel (0) target = $region9
    $region8: #{discriminator_forward.1} parent=1 // pred_region
      %s14 = ssub.s32 768, 768
      %15 = vsyncadd [#allocation3], %s14
      %s16 = sshll.u32 [#allocation2], 4
      %s17 = int_to_ptr.vmem [resolvable:$true] %s16
      %22 = dma.hbm_to_vmem [thread:$0]  %s1, 768, %s17, [#allocation3], 64, 64, 4
    $region9: #{discriminator_forward.1} parent=1 // pred_fallthru
      _
    // Predicated region
    $region10: #{discriminator_forward.1} parent=1 // pred_check
      _
    $region11: #{discriminator_forward.1} parent=1 // pred_check_branch
      %24 = sbr.rel (0) target = $region13
    $region12: #{discriminator_forward.1} parent=1 // pred_region
      _
    $region13: #{discriminator_forward.1} parent=1 // pred_fallthru
      _
    // Predicated region
    $region14: #{discriminator_forward.1} parent=1 // pred_check
      _
    $region15: #{discriminator_forward.1} parent=1 // pred_check_branch
      %26 = sbr.rel (0) target = $region17
    $region16: #{discriminator_forward.1} parent=1 // pred_region
      %27 = dma.done [#allocation3], 768
    $region17: #{discriminator_forward.1} parent=1 // pred_fallthru
      _
    %v29 = vld [vmem:[#allocation2] sm:$0xf]
    %v30 = vld [vmem:[#allocation2 + $0x4] sm:$0xf]
    %v31 = vld [vmem:[#allocation2 + $0x8] sm:$0xf]
    %v32 = vld [vmem:[#allocation2 + $0xc] sm:$0xf]
    %v33 = vld [vmem:[#allocation2 + $0x10] sm:$0xf]
    %v34 = vld [vmem:[#allocation2 + $0x14] sm:$0xf]
    %v35 = vld [vmem:[#allocation2 + $0x18] sm:$0xf]
    %v36 = vld [vmem:[#allocation2 + $0x1c] sm:$0xf]
    %v37 = vld [vmem:[#allocation2 + $0x20] sm:$0xf]
    %v38 = vld [vmem:[#allocation2 + $0x24] sm:$0xf]
    %v39 = vld [vmem:[#allocation2 + $0x28] sm:$0xf]
    %v40 = vld [vmem:[#allocation2 + $0x2c] sm:$0xf]
    %v41 = vld [vmem:[%s2 + $0x1] sm:$0x1]
    %v42 = vlaneseq
    %v43 = vshrl.u32 %v42, 7
    %v44 = vsub.s32 0, %v43
    %v45 = vrot.slane %v41, %v44
    %v46 = vld [vmem:[%s2] sm:$0x1]
    %v47 = vlaneseq
    %v48 = vshrl.u32 %v47, 7
    %v49 = vsub.s32 0, %v48
    %v50 = vrot.slane %v46, %v49
    %v51 = vld [vmem:[%s0] sm:$0xff]
    %v52 = vld [vmem:[%s0 + $0x8] sm:$0xff]
    %v53 = vld [vmem:[%s0 + $0x10] sm:$0xff]
    %v54 = vld [vmem:[%s0 + $0x18] sm:$0xff]
    %v55 = vld [vmem:[%s2 + $0x2] sm:$0x1]
    %57 = vset.pattern.permute.xlu0 0
    %58 = vperm.xlu0 %57, %v51
    %v59 = vpop.permute.xlu0 %58
    %62 = vset.pattern.permute.xlu0 0
    %63 = vperm.xlu0 %62, %v52
    %v64 = vpop.permute.xlu0 %63
    %67 = vset.pattern.permute.xlu0 0
    %68 = vperm.xlu0 %67, %v53
    %v69 = vpop.permute.xlu0 %68
    %72 = vset.pattern.permute.xlu0 0
    %73 = vperm.xlu0 %72, %v54
    %v74 = vpop.permute.xlu0 %73
    %v76 = vlaneseq
    %v77 = vshrl.u32 %v76, 7
    %v78 = vsub.s32 0, %v77
    %v79 = vrot.slane %v55, %v78
    %v80 = vmul.f32 %v59, %v79
    %v81 = vmul.f32 %v64, %v79
    %v82 = vmul.f32 %v69, %v79
    %v83 = vmul.f32 %v74, %v79
    %v84 = vadd.f32 %v50, %v80
    %v85 = vadd.f32 %v50, %v81
    %v86 = vadd.f32 %v50, %v82
    %v87 = vadd.f32 %v50, %v83
    %v88 = vld [vmem:[%s2 + $0x3] sm:$0x1]
    %89 = vset.pattern.permute.xlu0 1
    %90 = vperm.xlu0 %89, %v51
    %v91 = vpop.permute.xlu0 %90
    %93 = vset.pattern.permute.xlu0 1
    %94 = vperm.xlu0 %93, %v52
    %v95 = vpop.permute.xlu0 %94
    %97 = vset.pattern.permute.xlu0 1
    %98 = vperm.xlu0 %97, %v53
    %v99 = vpop.permute.xlu0 %98
    %101 = vset.pattern.permute.xlu0 1
    %102 = vperm.xlu0 %101, %v54
    %v103 = vpop.permute.xlu0 %102
    %v105 = vlaneseq
    %v106 = vshrl.u32 %v105, 7
    %v107 = vsub.s32 0, %v106
    %v108 = vrot.slane %v88, %v107
    %v109 = vmul.f32 %v91, %v108
    %v110 = vmul.f32 %v95, %v108
    %v111 = vmul.f32 %v99, %v108
    %v112 = vmul.f32 %v103, %v108
    %v113 = vadd.f32 %v84, %v109
    %v114 = vadd.f32 %v85, %v110
    %v115 = vadd.f32 %v86, %v111
    %v116 = vadd.f32 %v87, %v112
    %v121 = vunpack.c.l.b16 %v37
    %v122 = vunpack.c.l.b16 %v38
    %v123 = vunpack.c.l.b16 %v39
    %v124 = vunpack.c.l.b16 %v40
    %v125 = vpack.c.b16 %v122, %v121
    %v126 = vpack.c.b16 %v124, %v123
    %vm129 = vcmask 261120
    %v131 = vsel %vm129, 0, 0
    %133 = vmatprep.subr.bf16.mxu0 0
    %134 = vmatpush1.bf16.msra.mxu0 0
    %135 = vmatprep.subr.bf16.mxu0 0
    %136 = vmatpush1.bf16.msra.mxu0 0
    %137 = vmatprep.subr.bf16.mxu0 0
    %138 = vmatpush1.bf16.msra.mxu0 0
    %139 = vmatprep.subr.bf16.mxu0 0
    %140 = vmatpush1.bf16.msra.mxu0 0
    %141 = vmatprep.subr.bf16.mxu0 0
    %142 = vmatpush1.bf16.msra.mxu0 0
    %143 = vmatprep.subr.bf16.mxu0 0
    %144 = vmatpush1.bf16.msra.mxu0 0
    %145 = vmatprep.subr.bf16.mxu0 0
    %146 = vmatpush1.bf16.msra.mxu0 %v126
    %147 = vmatprep.subr.bf16.mxu0 0
    %148 = vmatpush1.bf16.msra.mxu0 %v125
    %149 = vmatprep.subr.bf16.mxu0 0
    %150 = vmatpush2.bf16.msra.mxu0 0
    %151 = vmatprep.subr.bf16.mxu0 0
    %152 = vmatpush2.bf16.msra.mxu0 0
    %153 = vmatprep.subr.bf16.mxu0 0
    %154 = vmatpush2.bf16.msra.mxu0 0
    %155 = vmatprep.subr.bf16.mxu0 0
    %156 = vmatpush2.bf16.msra.mxu0 0
    %157 = vmatprep.subr.bf16.mxu0 0
    %158 = vmatpush2.bf16.msra.mxu0 0
    %159 = vmatprep.subr.bf16.mxu0 0
    %160 = vmatpush2.bf16.msra.mxu0 0
    %161 = vmatprep.subr.bf16.mxu0 0
    %162 = vmatpush2.bf16.msra.mxu0 0
    %163 = vmatprep.subr.bf16.mxu0 0
    %164 = vmatpush2.bf16.msra.mxu0 0
    %165 = vmatprep.mubr.bf16.mxu0 0
    %166 = vmatmul.mubr.bf16.gmra.mxu0 %v131
    %v167 = vpop.f32.mrf.mxu0
    %v168 = vadd.f32 0.0, %v167
    %v169 = vpop.f32.mrf.mxu0
    %v170 = vpop.f32.mrf.mxu0
    %v171 = vpop.f32.mrf.mxu0
    %172 = vdwg.mxu0
    %v177 = vunpack.c.l.b16 %v29
    %v178 = vunpack.c.l.b16 %v30
    %v179 = vunpack.c.l.b16 %v31
    %v180 = vunpack.c.l.b16 %v32
    %v181 = vpack.c.b16 %v178, %v177
    %v182 = vpack.c.b16 %v180, %v179
    %185 = vmatprep.subr.bf16.mxu0 0
    %186 = vmatpush1.bf16.msra.mxu0 0
    %187 = vmatprep.subr.bf16.mxu0 0
    %188 = vmatpush1.bf16.msra.mxu0 0
    %189 = vmatprep.subr.bf16.mxu0 0
    %190 = vmatpush1.bf16.msra.mxu0 0
    %191 = vmatprep.subr.bf16.mxu0 0
    %192 = vmatpush1.bf16.msra.mxu0 0
    %193 = vmatprep.subr.bf16.mxu0 0
    %194 = vmatpush1.bf16.msra.mxu0 0
    %195 = vmatprep.subr.bf16.mxu0 0
    %196 = vmatpush1.bf16.msra.mxu0 0
    %197 = vmatprep.subr.bf16.mxu0 0
    %198 = vmatpush1.bf16.msra.mxu0 %v182
    %199 = vmatprep.subr.bf16.mxu0 0
    %200 = vmatpush1.bf16.msra.mxu0 %v181
    %201 = vmatprep.subr.bf16.mxu0 0
    %202 = vmatpush2.bf16.msra.mxu0 0
    %203 = vmatprep.subr.bf16.mxu0 0
    %204 = vmatpush2.bf16.msra.mxu0 0
    %205 = vmatprep.subr.bf16.mxu0 0
    %206 = vmatpush2.bf16.msra.mxu0 0
    %207 = vmatprep.subr.bf16.mxu0 0
    %208 = vmatpush2.bf16.msra.mxu0 0
    %209 = vmatprep.subr.bf16.mxu0 0
    %210 = vmatpush2.bf16.msra.mxu0 0
    %211 = vmatprep.subr.bf16.mxu0 0
    %212 = vmatpush2.bf16.msra.mxu0 0
    %213 = vmatprep.subr.bf16.mxu0 0
    %214 = vmatpush2.bf16.msra.mxu0 0
    %215 = vmatprep.subr.bf16.mxu0 0
    %216 = vmatpush2.bf16.msra.mxu0 0
    %217 = vmatprep.mubr.bf16.mxu0 0
    %218 = vmatmul.mubr.bf16.gmra.mxu0 %v131
    %v219 = vpop.f32.mrf.mxu0
    %v220 = vadd.f32 %v113, %v219
    %v221 = vpop.f32.mrf.mxu0
    %v222 = vpop.f32.mrf.mxu0
    %v223 = vpop.f32.mrf.mxu0
    %224 = vdwg.mxu0
    %v225 = vmul.f32 %v220, 0.5
    %v226 = vtanh.pop %v225
    %v227 = vmul.f32 %v226, 0.5
    %v228 = vadd.f32 %v227, 0.5
    %v229 = vtanh.pop %v220
    %v230 = vmul.f32 %v228, 0.0
    %232 = vrot.lane.b32.xlu0 %v229, 32
    %v233 = vpop.permute.xlu0 %232
    %v235 = vmul.f32 %v228, %v233
    %237 = vrot.lane.b32.xlu0 %v235, 32
    %v238 = vpop.permute.xlu0 %237
    %v240 = vadd.f32 %v230, %v238
    %v241 = vtanh.pop %v240
    %243 = vrot.lane.b32.xlu0 %v241, 32
    %v244 = vpop.permute.xlu0 %243
    %v246 = vmul.f32 %v228, %v244
    %v247 = vpack.c.bf16 %v246, %v246
    %249 = vrot.lane.b32.xlu0 %v247, 64
    %v250 = vpop.permute.xlu0 %249
    %v255 = vunpack.c.l.b16 %v33
    %v256 = vunpack.c.l.b16 %v34
    %v257 = vunpack.c.l.b16 %v35
    %v258 = vunpack.c.l.b16 %v36
    %v259 = vpack.c.b16 %v256, %v255
    %v260 = vpack.c.b16 %v258, %v257
    %v264 = vsel %vm129, %v250, 0
    %266 = vmatprep.subr.bf16.mxu0 0
    %267 = vmatpush1.bf16.msra.mxu0 0
    %268 = vmatprep.subr.bf16.mxu0 0
    %269 = vmatpush1.bf16.msra.mxu0 0
    %270 = vmatprep.subr.bf16.mxu0 0
    %271 = vmatpush1.bf16.msra.mxu0 0
    %272 = vmatprep.subr.bf16.mxu0 0
    %273 = vmatpush1.bf16.msra.mxu0 0
    %274 = vmatprep.subr.bf16.mxu0 0
    %275 = vmatpush1.bf16.msra.mxu0 0
    %276 = vmatprep.subr.bf16.mxu0 0
    %277 = vmatpush1.bf16.msra.mxu0 0
    %278 = vmatprep.subr.bf16.mxu0 0
    %279 = vmatpush1.bf16.msra.mxu0 %v260
    %280 = vmatprep.subr.bf16.mxu0 0
    %281 = vmatpush1.bf16.msra.mxu0 %v259
    %282 = vmatprep.subr.bf16.mxu0 0
    %283 = vmatpush2.bf16.msra.mxu0 0
    %284 = vmatprep.subr.bf16.mxu0 0
    %285 = vmatpush2.bf16.msra.mxu0 0
    %286 = vmatprep.subr.bf16.mxu0 0
    %287 = vmatpush2.bf16.msra.mxu0 0
    %288 = vmatprep.subr.bf16.mxu0 0
    %289 = vmatpush2.bf16.msra.mxu0 0
    %290 = vmatprep.subr.bf16.mxu0 0
    %291 = vmatpush2.bf16.msra.mxu0 0
    %292 = vmatprep.subr.bf16.mxu0 0
    %293 = vmatpush2.bf16.msra.mxu0 0
    %294 = vmatprep.subr.bf16.mxu0 0
    %295 = vmatpush2.bf16.msra.mxu0 0
    %296 = vmatprep.subr.bf16.mxu0 0
    %297 = vmatpush2.bf16.msra.mxu0 0
    %298 = vmatprep.mubr.bf16.mxu0 0
    %299 = vmatmul.mubr.bf16.gmra.mxu0 %v264
    %v300 = vpop.f32.mrf.mxu0
    %v301 = vadd.f32 %v168, %v300
    %v302 = vpop.f32.mrf.mxu0
    %v303 = vpop.f32.mrf.mxu0
    %v304 = vpop.f32.mrf.mxu0
    %305 = vdwg.mxu0
    %v306 = vadd.f32 %v301, %v45
    %v307 = vmul.f32 %v306, 0.5
    %v308 = vtanh.pop %v307
    %v309 = vmul.f32 %v308, 0.5
    %v310 = vadd.f32 %v309, 0.5
    %v311 = vtanh.pop %v306
    %v312 = vmul.f32 %v310, 0.0
    %314 = vrot.lane.b32.xlu0 %v311, 32
    %v315 = vpop.permute.xlu0 %314
    %v317 = vmul.f32 %v310, %v315
    %319 = vrot.lane.b32.xlu0 %v317, 32
    %v320 = vpop.permute.xlu0 %319
    %v322 = vadd.f32 %v312, %v320
    %v323 = vtanh.pop %v322
    %325 = vrot.lane.b32.xlu0 %v323, 32
    %v326 = vpop.permute.xlu0 %325
    %v328 = vmul.f32 %v310, %v326
    %v329 = vpack.c.bf16 %v328, %v328
    %331 = vrot.lane.b32.xlu0 %v329, 64
    %v332 = vpop.permute.xlu0 %331
    %v334 = vsel %vm129, %v332, 0
    %336 = vmatprep.subr.bf16.mxu0 0
    %337 = vmatpush1.bf16.msra.mxu0 0
    %338 = vmatprep.subr.bf16.mxu0 0
    %339 = vmatpush1.bf16.msra.mxu0 0
    %340 = vmatprep.subr.bf16.mxu0 0
    %341 = vmatpush1.bf16.msra.mxu0 0
    %342 = vmatprep.subr.bf16.mxu0 0
    %343 = vmatpush1.bf16.msra.mxu0 0
    %344 = vmatprep.subr.bf16.mxu0 0
    %345 = vmatpush1.bf16.msra.mxu0 0
    %346 = vmatprep.subr.bf16.mxu0 0
    %347 = vmatpush1.bf16.msra.mxu0 0
    %348 = vmatprep.subr.bf16.mxu0 0
    %349 = vmatpush1.bf16.msra.mxu0 %v126
    %350 = vmatprep.subr.bf16.mxu0 0
    %351 = vmatpush1.bf16.msra.mxu0 %v125
    %352 = vmatprep.subr.bf16.mxu0 0
    %353 = vmatpush2.bf16.msra.mxu0 0
    %354 = vmatprep.subr.bf16.mxu0 0
    %355 = vmatpush2.bf16.msra.mxu0 0
    %356 = vmatprep.subr.bf16.mxu0 0
    %357 = vmatpush2.bf16.msra.mxu0 0
    %358 = vmatprep.subr.bf16.mxu0 0
    %359 = vmatpush2.bf16.msra.mxu0 0
    %360 = vmatprep.subr.bf16.mxu0 0
    %361 = vmatpush2.bf16.msra.mxu0 0
    %362 = vmatprep.subr.bf16.mxu0 0
    %363 = vmatpush2.bf16.msra.mxu0 0
    %364 = vmatprep.subr.bf16.mxu0 0
    %365 = vmatpush2.bf16.msra.mxu0 0
    %366 = vmatprep.subr.bf16.mxu0 0
    %367 = vmatpush2.bf16.msra.mxu0 0
    %368 = vmatprep.mubr.bf16.mxu0 0
    %369 = vmatmul.mubr.bf16.gmra.mxu0 %v334
    %v370 = vpop.f32.mrf.mxu0
    %v371 = vadd.f32 0.0, %v370
    %v372 = vpop.f32.mrf.mxu0
    %v373 = vpop.f32.mrf.mxu0
    %v374 = vpop.f32.mrf.mxu0
    %375 = vdwg.mxu0
    %v377 = vrot.slane %v113, 4
    %379 = vmatprep.subr.bf16.mxu0 0
    %380 = vmatpush1.bf16.msra.mxu0 0
    %381 = vmatprep.subr.bf16.mxu0 0
    %382 = vmatpush1.bf16.msra.mxu0 0
    %383 = vmatprep.subr.bf16.mxu0 0
    %384 = vmatpush1.bf16.msra.mxu0 0
    %385 = vmatprep.subr.bf16.mxu0 0
    %386 = vmatpush1.bf16.msra.mxu0 0
    %387 = vmatprep.subr.bf16.mxu0 0
    %388 = vmatpush1.bf16.msra.mxu0 0
    %389 = vmatprep.subr.bf16.mxu0 0
    %390 = vmatpush1.bf16.msra.mxu0 0
    %391 = vmatprep.subr.bf16.mxu0 0
    %392 = vmatpush1.bf16.msra.mxu0 %v182
    %393 = vmatprep.subr.bf16.mxu0 0
    %394 = vmatpush1.bf16.msra.mxu0 %v181
    %395 = vmatprep.subr.bf16.mxu0 0
    %396 = vmatpush2.bf16.msra.mxu0 0
    %397 = vmatprep.subr.bf16.mxu0 0
    %398 = vmatpush2.bf16.msra.mxu0 0
    %399 = vmatprep.subr.bf16.mxu0 0
    %400 = vmatpush2.bf16.msra.mxu0 0
    %401 = vmatprep.subr.bf16.mxu0 0
    %402 = vmatpush2.bf16.msra.mxu0 0
    %403 = vmatprep.subr.bf16.mxu0 0
    %404 = vmatpush2.bf16.msra.mxu0 0
    %405 = vmatprep.subr.bf16.mxu0 0
    %406 = vmatpush2.bf16.msra.mxu0 0
    %407 = vmatprep.subr.bf16.mxu0 0
    %408 = vmatpush2.bf16.msra.mxu0 0
    %409 = vmatprep.subr.bf16.mxu0 0
    %410 = vmatpush2.bf16.msra.mxu0 0
    %411 = vmatprep.mubr.bf16.mxu0 0
    %412 = vmatmul.mubr.bf16.gmra.mxu0 %v264
    %v413 = vpop.f32.mrf.mxu0
    %v414 = vadd.f32 %v377, %v413
    %v415 = vpop.f32.mrf.mxu0
    %v416 = vpop.f32.mrf.mxu0
    %v417 = vpop.f32.mrf.mxu0
    %418 = vdwg.mxu0
    %v419 = vmul.f32 %v414, 0.5
    %v420 = vtanh.pop %v419
    %v421 = vmul.f32 %v420, 0.5
    %v422 = vadd.f32 %v421, 0.5
    %v423 = vtanh.pop %v414
    %v424 = vmul.f32 %v422, %v240
    %426 = vrot.lane.b32.xlu0 %v423, 32
    %v427 = vpop.permute.xlu0 %426
    %v429 = vmul.f32 %v422, %v427
    %431 = vrot.lane.b32.xlu0 %v429, 32
    %v432 = vpop.permute.xlu0 %431
    %v434 = vadd.f32 %v424, %v432
    %v435 = vtanh.pop %v434
    %437 = vrot.lane.b32.xlu0 %v435, 32
    %v438 = vpop.permute.xlu0 %437
    %v440 = vmul.f32 %v422, %v438
    %v441 = vpack.c.bf16 %v440, %v440
    %443 = vrot.lane.b32.xlu0 %v441, 64
    %v444 = vpop.permute.xlu0 %443
    %v446 = vsel %vm129, %v444, 0
    %448 = vmatprep.subr.bf16.mxu0 0
    %449 = vmatpush1.bf16.msra.mxu0 0
    %450 = vmatprep.subr.bf16.mxu0 0
    %451 = vmatpush1.bf16.msra.mxu0 0
    %452 = vmatprep.subr.bf16.mxu0 0
    %453 = vmatpush1.bf16.msra.mxu0 0
    %454 = vmatprep.subr.bf16.mxu0 0
    %455 = vmatpush1.bf16.msra.mxu0 0
    %456 = vmatprep.subr.bf16.mxu0 0
    %457 = vmatpush1.bf16.msra.mxu0 0
    %458 = vmatprep.subr.bf16.mxu0 0
    %459 = vmatpush1.bf16.msra.mxu0 0
    %460 = vmatprep.subr.bf16.mxu0 0
    %461 = vmatpush1.bf16.msra.mxu0 %v260
    %462 = vmatprep.subr.bf16.mxu0 0
    %463 = vmatpush1.bf16.msra.mxu0 %v259
    %464 = vmatprep.subr.bf16.mxu0 0
    %465 = vmatpush2.bf16.msra.mxu0 0
    %466 = vmatprep.subr.bf16.mxu0 0
    %467 = vmatpush2.bf16.msra.mxu0 0
    %468 = vmatprep.subr.bf16.mxu0 0
    %469 = vmatpush2.bf16.msra.mxu0 0
    %470 = vmatprep.subr.bf16.mxu0 0
    %471 = vmatpush2.bf16.msra.mxu0 0
    %472 = vmatprep.subr.bf16.mxu0 0
    %473 = vmatpush2.bf16.msra.mxu0 0
    %474 = vmatprep.subr.bf16.mxu0 0
    %475 = vmatpush2.bf16.msra.mxu0 0
    %476 = vmatprep.subr.bf16.mxu0 0
    %477 = vmatpush2.bf16.msra.mxu0 0
    %478 = vmatprep.subr.bf16.mxu0 0
    %479 = vmatpush2.bf16.msra.mxu0 0
    %480 = vmatprep.mubr.bf16.mxu0 0
    %481 = vmatmul.mubr.bf16.gmra.mxu0 %v446
    %v482 = vpop.f32.mrf.mxu0
    %v483 = vadd.f32 %v371, %v482
    %v484 = vpop.f32.mrf.mxu0
    %v485 = vpop.f32.mrf.mxu0
    %v486 = vpop.f32.mrf.mxu0
    %487 = vdwg.mxu0
    %v488 = vadd.f32 %v483, %v45
    %v489 = vmul.f32 %v488, 0.5
    %v490 = vtanh.pop %v489
    %v491 = vmul.f32 %v490, 0.5
    %v492 = vadd.f32 %v491, 0.5
    %v493 = vtanh.pop %v488
    %v494 = vmul.f32 %v492, %v322
    %496 = vrot.lane.b32.xlu0 %v493, 32
    %v497 = vpop.permute.xlu0 %496
    %v499 = vmul.f32 %v492, %v497
    %501 = vrot.lane.b32.xlu0 %v499, 32
    %v502 = vpop.permute.xlu0 %501
    %v504 = vadd.f32 %v494, %v502
    %v505 = vtanh.pop %v504
    %507 = vrot.lane.b32.xlu0 %v505, 32
    %v508 = vpop.permute.xlu0 %507
    %v510 = vmul.f32 %v492, %v508
    %v511 = vpack.c.bf16 %v510, %v510
    %513 = vrot.lane.b32.xlu0 %v511, 64
    %v514 = vpop.permute.xlu0 %513
    %v516 = vsel %vm129, %v514, 0
    %518 = vmatprep.subr.bf16.mxu0 0
    %519 = vmatpush1.bf16.msra.mxu0 0
    %520 = vmatprep.subr.bf16.mxu0 0
    %521 = vmatpush1.bf16.msra.mxu0 0
    %522 = vmatprep.subr.bf16.mxu0 0
    %523 = vmatpush1.bf16.msra.mxu0 0
    %524 = vmatprep.subr.bf16.mxu0 0
    %525 = vmatpush1.bf16.msra.mxu0 0
    %526 = vmatprep.subr.bf16.mxu0 0
    %527 = vmatpush1.bf16.msra.mxu0 0
    %528 = vmatprep.subr.bf16.mxu0 0
    %529 = vmatpush1.bf16.msra.mxu0 0
    %530 = vmatprep.subr.bf16.mxu0 0
    %531 = vmatpush1.bf16.msra.mxu0 %v126
    %532 = vmatprep.subr.bf16.mxu0 0
    %533 = vmatpush1.bf16.msra.mxu0 %v125
    %534 = vmatprep.subr.bf16.mxu0 0
    %535 = vmatpush2.bf16.msra.mxu0 0
    %536 = vmatprep.subr.bf16.mxu0 0
    %537 = vmatpush2.bf16.msra.mxu0 0
    %538 = vmatprep.subr.bf16.mxu0 0
    %539 = vmatpush2.bf16.msra.mxu0 0
    %540 = vmatprep.subr.bf16.mxu0 0
    %541 = vmatpush2.bf16.msra.mxu0 0
    %542 = vmatprep.subr.bf16.mxu0 0
    %543 = vmatpush2.bf16.msra.mxu0 0
    %544 = vmatprep.subr.bf16.mxu0 0
    %545 = vmatpush2.bf16.msra.mxu0 0
    %546 = vmatprep.subr.bf16.mxu0 0
    %547 = vmatpush2.bf16.msra.mxu0 0
    %548 = vmatprep.subr.bf16.mxu0 0
    %549 = vmatpush2.bf16.msra.mxu0 0
    %550 = vmatprep.mubr.bf16.mxu0 0
    %551 = vmatmul.mubr.bf16.gmra.mxu0 %v516
    %v552 = vpop.f32.mrf.mxu0
    %v553 = vadd.f32 0.0, %v552
    %v554 = vpop.f32.mrf.mxu0
    %v555 = vpop.f32.mrf.mxu0
    %v556 = vpop.f32.mrf.mxu0
    %557 = vdwg.mxu0
    %558 = vmatprep.subr.bf16.mxu0 0
    %559 = vmatpush1.bf16.msra.mxu0 0
    %560 = vmatprep.subr.bf16.mxu0 0
    %561 = vmatpush1.bf16.msra.mxu0 0
    %562 = vmatprep.subr.bf16.mxu0 0
    %563 = vmatpush1.bf16.msra.mxu0 0
    %564 = vmatprep.subr.bf16.mxu0 0
    %565 = vmatpush1.bf16.msra.mxu0 0
    %566 = vmatprep.subr.bf16.mxu0 0
    %567 = vmatpush1.bf16.msra.mxu0 0
    %568 = vmatprep.subr.bf16.mxu0 0
    %569 = vmatpush1.bf16.msra.mxu0 0
    %570 = vmatprep.subr.bf16.mxu0 0
    %571 = vmatpush1.bf16.msra.mxu0 %v182
    %572 = vmatprep.subr.bf16.mxu0 0
    %573 = vmatpush1.bf16.msra.mxu0 %v181
    %574 = vmatprep.subr.bf16.mxu0 0
    %575 = vmatpush2.bf16.msra.mxu0 0
    %576 = vmatprep.subr.bf16.mxu0 0
    %577 = vmatpush2.bf16.msra.mxu0 0
    %578 = vmatprep.subr.bf16.mxu0 0
    %579 = vmatpush2.bf16.msra.mxu0 0
    %580 = vmatprep.subr.bf16.mxu0 0
    %581 = vmatpush2.bf16.msra.mxu0 0
    %582 = vmatprep.subr.bf16.mxu0 0
    %583 = vmatpush2.bf16.msra.mxu0 0
    %584 = vmatprep.subr.bf16.mxu0 0
    %585 = vmatpush2.bf16.msra.mxu0 0
    %586 = vmatprep.subr.bf16.mxu0 0
    %587 = vmatpush2.bf16.msra.mxu0 0
    %588 = vmatprep.subr.bf16.mxu0 0
    %589 = vmatpush2.bf16.msra.mxu0 0
    %590 = vmatprep.mubr.bf16.mxu0 0
    %591 = vmatmul.mubr.bf16.gmra.mxu0 %v446
    %v592 = vpop.f32.mrf.mxu0
    %v593 = vadd.f32 %v114, %v592
    %v594 = vpop.f32.mrf.mxu0
    %v595 = vpop.f32.mrf.mxu0
    %v596 = vpop.f32.mrf.mxu0
    %597 = vdwg.mxu0
    %v598 = vmul.f32 %v593, 0.5
    %v599 = vtanh.pop %v598
    %v600 = vmul.f32 %v599, 0.5
    %v601 = vadd.f32 %v600, 0.5
    %v602 = vtanh.pop %v593
    %v603 = vmul.f32 %v601, %v434
    %605 = vrot.lane.b32.xlu0 %v602, 32
    %v606 = vpop.permute.xlu0 %605
    %v608 = vmul.f32 %v601, %v606
    %610 = vrot.lane.b32.xlu0 %v608, 32
    %v611 = vpop.permute.xlu0 %610
    %v613 = vadd.f32 %v603, %v611
    %v614 = vtanh.pop %v613
    %616 = vrot.lane.b32.xlu0 %v614, 32
    %v617 = vpop.permute.xlu0 %616
    %v619 = vmul.f32 %v601, %v617
    %v620 = vpack.c.bf16 %v619, %v619
    %622 = vrot.lane.b32.xlu0 %v620, 64
    %v623 = vpop.permute.xlu0 %622
    %v625 = vsel %vm129, %v623, 0
    %627 = vmatprep.subr.bf16.mxu0 0
    %628 = vmatpush1.bf16.msra.mxu0 0
    %629 = vmatprep.subr.bf16.mxu0 0
    %630 = vmatpush1.bf16.msra.mxu0 0
    %631 = vmatprep.subr.bf16.mxu0 0
    %632 = vmatpush1.bf16.msra.mxu0 0
    %633 = vmatprep.subr.bf16.mxu0 0
    %634 = vmatpush1.bf16.msra.mxu0 0
    %635 = vmatprep.subr.bf16.mxu0 0
    %636 = vmatpush1.bf16.msra.mxu0 0
    %637 = vmatprep.subr.bf16.mxu0 0
    %638 = vmatpush1.bf16.msra.mxu0 0
    %639 = vmatprep.subr.bf16.mxu0 0
    %640 = vmatpush1.bf16.msra.mxu0 %v260
    %641 = vmatprep.subr.bf16.mxu0 0
    %642 = vmatpush1.bf16.msra.mxu0 %v259
    %643 = vmatprep.subr.bf16.mxu0 0
    %644 = vmatpush2.bf16.msra.mxu0 0
    %645 = vmatprep.subr.bf16.mxu0 0
    %646 = vmatpush2.bf16.msra.mxu0 0
    %647 = vmatprep.subr.bf16.mxu0 0
    %648 = vmatpush2.bf16.msra.mxu0 0
    %649 = vmatprep.subr.bf16.mxu0 0
    %650 = vmatpush2.bf16.msra.mxu0 0
    %651 = vmatprep.subr.bf16.mxu0 0
    %652 = vmatpush2.bf16.msra.mxu0 0
    %653 = vmatprep.subr.bf16.mxu0 0
    %654 = vmatpush2.bf16.msra.mxu0 0
    %655 = vmatprep.subr.bf16.mxu0 0
    %656 = vmatpush2.bf16.msra.mxu0 0
    %657 = vmatprep.subr.bf16.mxu0 0
    %658 = vmatpush2.bf16.msra.mxu0 0
    %659 = vmatprep.mubr.bf16.mxu0 0
    %660 = vmatmul.mubr.bf16.gmra.mxu0 %v625
    %v661 = vpop.f32.mrf.mxu0
    %v662 = vadd.f32 %v553, %v661
    %v663 = vpop.f32.mrf.mxu0
    %v664 = vpop.f32.mrf.mxu0
    %v665 = vpop.f32.mrf.mxu0
    %666 = vdwg.mxu0
    %v667 = vadd.f32 %v662, %v45
    %v668 = vmul.f32 %v667, 0.5
    %v669 = vtanh.pop %v668
    %v670 = vmul.f32 %v669, 0.5
    %v671 = vadd.f32 %v670, 0.5
    %v672 = vtanh.pop %v667
    %v673 = vmul.f32 %v671, %v504
    %675 = vrot.lane.b32.xlu0 %v672, 32
    %v676 = vpop.permute.xlu0 %675
    %v678 = vmul.f32 %v671, %v676
    %680 = vrot.lane.b32.xlu0 %v678, 32
    %v681 = vpop.permute.xlu0 %680
    %v683 = vadd.f32 %v673, %v681
    %v684 = vtanh.pop %v683
    %686 = vrot.lane.b32.xlu0 %v684, 32
    %v687 = vpop.permute.xlu0 %686
    %v689 = vmul.f32 %v671, %v687
    %v690 = vpack.c.bf16 %v689, %v689
    %692 = vrot.lane.b32.xlu0 %v690, 64
    %v693 = vpop.permute.xlu0 %692
    %v695 = vsel %vm129, %v693, 0
    %697 = vmatprep.subr.bf16.mxu0 0
    %698 = vmatpush1.bf16.msra.mxu0 0
    %699 = vmatprep.subr.bf16.mxu0 0
    %700 = vmatpush1.bf16.msra.mxu0 0
    %701 = vmatprep.subr.bf16.mxu0 0
    %702 = vmatpush1.bf16.msra.mxu0 0
    %703 = vmatprep.subr.bf16.mxu0 0
    %704 = vmatpush1.bf16.msra.mxu0 0
    %705 = vmatprep.subr.bf16.mxu0 0
    %706 = vmatpush1.bf16.msra.mxu0 0
    %707 = vmatprep.subr.bf16.mxu0 0
    %708 = vmatpush1.bf16.msra.mxu0 0
    %709 = vmatprep.subr.bf16.mxu0 0
    %710 = vmatpush1.bf16.msra.mxu0 %v126
    %711 = vmatprep.subr.bf16.mxu0 0
    %712 = vmatpush1.bf16.msra.mxu0 %v125
    %713 = vmatprep.subr.bf16.mxu0 0
    %714 = vmatpush2.bf16.msra.mxu0 0
    %715 = vmatprep.subr.bf16.mxu0 0
    %716 = vmatpush2.bf16.msra.mxu0 0
    %717 = vmatprep.subr.bf16.mxu0 0
    %718 = vmatpush2.bf16.msra.mxu0 0
    %719 = vmatprep.subr.bf16.mxu0 0
    %720 = vmatpush2.bf16.msra.mxu0 0
    %721 = vmatprep.subr.bf16.mxu0 0
    %722 = vmatpush2.bf16.msra.mxu0 0
    %723 = vmatprep.subr.bf16.mxu0 0
    %724 = vmatpush2.bf16.msra.mxu0 0
    %725 = vmatprep.subr.bf16.mxu0 0
    %726 = vmatpush2.bf16.msra.mxu0 0
    %727 = vmatprep.subr.bf16.mxu0 0
    %728 = vmatpush2.bf16.msra.mxu0 0
    %729 = vmatprep.mubr.bf16.mxu0 0
    %730 = vmatmul.mubr.bf16.gmra.mxu0 %v695
    %v731 = vpop.f32.mrf.mxu0
    %v732 = vadd.f32 0.0, %v731
    %v733 = vpop.f32.mrf.mxu0
    %v734 = vpop.f32.mrf.mxu0
    %v735 = vpop.f32.mrf.mxu0
    %736 = vdwg.mxu0
    %v738 = vrot.slane %v114, 4
    %740 = vmatprep.subr.bf16.mxu0 0
    %741 = vmatpush1.bf16.msra.mxu0 0
    %742 = vmatprep.subr.bf16.mxu0 0
    %743 = vmatpush1.bf16.msra.mxu0 0
    %744 = vmatprep.subr.bf16.mxu0 0
    %745 = vmatpush1.bf16.msra.mxu0 0
    %746 = vmatprep.subr.bf16.mxu0 0
    %747 = vmatpush1.bf16.msra.mxu0 0
    %748 = vmatprep.subr.bf16.mxu0 0
    %749 = vmatpush1.bf16.msra.mxu0 0
    %750 = vmatprep.subr.bf16.mxu0 0
    %751 = vmatpush1.bf16.msra.mxu0 0
    %752 = vmatprep.subr.bf16.mxu0 0
    %753 = vmatpush1.bf16.msra.mxu0 %v182
    %754 = vmatprep.subr.bf16.mxu0 0
    %755 = vmatpush1.bf16.msra.mxu0 %v181
    %756 = vmatprep.subr.bf16.mxu0 0
    %757 = vmatpush2.bf16.msra.mxu0 0
    %758 = vmatprep.subr.bf16.mxu0 0
    %759 = vmatpush2.bf16.msra.mxu0 0
    %760 = vmatprep.subr.bf16.mxu0 0
    %761 = vmatpush2.bf16.msra.mxu0 0
    %762 = vmatprep.subr.bf16.mxu0 0
    %763 = vmatpush2.bf16.msra.mxu0 0
    %764 = vmatprep.subr.bf16.mxu0 0
    %765 = vmatpush2.bf16.msra.mxu0 0
    %766 = vmatprep.subr.bf16.mxu0 0
    %767 = vmatpush2.bf16.msra.mxu0 0
    %768 = vmatprep.subr.bf16.mxu0 0
    %769 = vmatpush2.bf16.msra.mxu0 0
    %770 = vmatprep.subr.bf16.mxu0 0
    %771 = vmatpush2.bf16.msra.mxu0 0
    %772 = vmatprep.mubr.bf16.mxu0 0
    %773 = vmatmul.mubr.bf16.gmra.mxu0 %v625
    %v774 = vpop.f32.mrf.mxu0
    %v775 = vadd.f32 %v738, %v774
    %v776 = vpop.f32.mrf.mxu0
    %v777 = vpop.f32.mrf.mxu0
    %v778 = vpop.f32.mrf.mxu0
    %779 = vdwg.mxu0
    %v780 = vmul.f32 %v775, 0.5
    %v781 = vtanh.pop %v780
    %v782 = vmul.f32 %v781, 0.5
    %v783 = vadd.f32 %v782, 0.5
    %v784 = vtanh.pop %v775
    %v785 = vmul.f32 %v783, %v613
    %787 = vrot.lane.b32.xlu0 %v784, 32
    %v788 = vpop.permute.xlu0 %787
    %v790 = vmul.f32 %v783, %v788
    %792 = vrot.lane.b32.xlu0 %v790, 32
    %v793 = vpop.permute.xlu0 %792
    %v795 = vadd.f32 %v785, %v793
    %v796 = vtanh.pop %v795
    %798 = vrot.lane.b32.xlu0 %v796, 32
    %v799 = vpop.permute.xlu0 %798
    %v801 = vmul.f32 %v783, %v799
    %v802 = vpack.c.bf16 %v801, %v801
    %804 = vrot.lane.b32.xlu0 %v802, 64
    %v805 = vpop.permute.xlu0 %804
    %v807 = vsel %vm129, %v805, 0
    %809 = vmatprep.subr.bf16.mxu0 0
    %810 = vmatpush1.bf16.msra.mxu0 0
    %811 = vmatprep.subr.bf16.mxu0 0
    %812 = vmatpush1.bf16.msra.mxu0 0
    %813 = vmatprep.subr.bf16.mxu0 0
    %814 = vmatpush1.bf16.msra.mxu0 0
    %815 = vmatprep.subr.bf16.mxu0 0
    %816 = vmatpush1.bf16.msra.mxu0 0
    %817 = vmatprep.subr.bf16.mxu0 0
    %818 = vmatpush1.bf16.msra.mxu0 0
    %819 = vmatprep.subr.bf16.mxu0 0
    %820 = vmatpush1.bf16.msra.mxu0 0
    %821 = vmatprep.subr.bf16.mxu0 0
    %822 = vmatpush1.bf16.msra.mxu0 %v260
    %823 = vmatprep.subr.bf16.mxu0 0
    %824 = vmatpush1.bf16.msra.mxu0 %v259
    %825 = vmatprep.subr.bf16.mxu0 0
    %826 = vmatpush2.bf16.msra.mxu0 0
    %827 = vmatprep.subr.bf16.mxu0 0
    %828 = vmatpush2.bf16.msra.mxu0 0
    %829 = vmatprep.subr.bf16.mxu0 0
    %830 = vmatpush2.bf16.msra.mxu0 0
    %831 = vmatprep.subr.bf16.mxu0 0
    %832 = vmatpush2.bf16.msra.mxu0 0
    %833 = vmatprep.subr.bf16.mxu0 0
    %834 = vmatpush2.bf16.msra.mxu0 0
    %835 = vmatprep.subr.bf16.mxu0 0
    %836 = vmatpush2.bf16.msra.mxu0 0
    %837 = vmatprep.subr.bf16.mxu0 0
    %838 = vmatpush2.bf16.msra.mxu0 0
    %839 = vmatprep.subr.bf16.mxu0 0
    %840 = vmatpush2.bf16.msra.mxu0 0
    %841 = vmatprep.mubr.bf16.mxu0 0
    %842 = vmatmul.mubr.bf16.gmra.mxu0 %v807
    %v843 = vpop.f32.mrf.mxu0
    %v844 = vadd.f32 %v732, %v843
    %v845 = vpop.f32.mrf.mxu0
    %v846 = vpop.f32.mrf.mxu0
    %v847 = vpop.f32.mrf.mxu0
    %848 = vdwg.mxu0
    %v849 = vadd.f32 %v844, %v45
    %v850 = vmul.f32 %v849, 0.5
    %v851 = vtanh.pop %v850
    %v852 = vmul.f32 %v851, 0.5
    %v853 = vadd.f32 %v852, 0.5
    %v854 = vtanh.pop %v849
    %v855 = vmul.f32 %v853, %v683
    %857 = vrot.lane.b32.xlu0 %v854, 32
    %v858 = vpop.permute.xlu0 %857
    %v860 = vmul.f32 %v853, %v858
    %862 = vrot.lane.b32.xlu0 %v860, 32
    %v863 = vpop.permute.xlu0 %862
    %v865 = vadd.f32 %v855, %v863
    %v866 = vtanh.pop %v865
    %868 = vrot.lane.b32.xlu0 %v866, 32
    %v869 = vpop.permute.xlu0 %868
    %v871 = vmul.f32 %v853, %v869
    %v872 = vpack.c.bf16 %v871, %v871
    %874 = vrot.lane.b32.xlu0 %v872, 64
    %v875 = vpop.permute.xlu0 %874
    %v877 = vsel %vm129, %v875, 0
    %879 = vmatprep.subr.bf16.mxu0 0
    %880 = vmatpush1.bf16.msra.mxu0 0
    %881 = vmatprep.subr.bf16.mxu0 0
    %882 = vmatpush1.bf16.msra.mxu0 0
    %883 = vmatprep.subr.bf16.mxu0 0
    %884 = vmatpush1.bf16.msra.mxu0 0
    %885 = vmatprep.subr.bf16.mxu0 0
    %886 = vmatpush1.bf16.msra.mxu0 0
    %887 = vmatprep.subr.bf16.mxu0 0
    %888 = vmatpush1.bf16.msra.mxu0 0
    %889 = vmatprep.subr.bf16.mxu0 0
    %890 = vmatpush1.bf16.msra.mxu0 0
    %891 = vmatprep.subr.bf16.mxu0 0
    %892 = vmatpush1.bf16.msra.mxu0 %v126
    %893 = vmatprep.subr.bf16.mxu0 0
    %894 = vmatpush1.bf16.msra.mxu0 %v125
    %895 = vmatprep.subr.bf16.mxu0 0
    %896 = vmatpush2.bf16.msra.mxu0 0
    %897 = vmatprep.subr.bf16.mxu0 0
    %898 = vmatpush2.bf16.msra.mxu0 0
    %899 = vmatprep.subr.bf16.mxu0 0
    %900 = vmatpush2.bf16.msra.mxu0 0
    %901 = vmatprep.subr.bf16.mxu0 0
    %902 = vmatpush2.bf16.msra.mxu0 0
    %903 = vmatprep.subr.bf16.mxu0 0
    %904 = vmatpush2.bf16.msra.mxu0 0
    %905 = vmatprep.subr.bf16.mxu0 0
    %906 = vmatpush2.bf16.msra.mxu0 0
    %907 = vmatprep.subr.bf16.mxu0 0
    %908 = vmatpush2.bf16.msra.mxu0 0
    %909 = vmatprep.subr.bf16.mxu0 0
    %910 = vmatpush2.bf16.msra.mxu0 0
    %911 = vmatprep.mubr.bf16.mxu0 0
    %912 = vmatmul.mubr.bf16.gmra.mxu0 %v877
    %v913 = vpop.f32.mrf.mxu0
    %v914 = vadd.f32 0.0, %v913
    %v915 = vpop.f32.mrf.mxu0
    %v916 = vpop.f32.mrf.mxu0
    %v917 = vpop.f32.mrf.mxu0
    %918 = vdwg.mxu0
    %919 = vmatprep.subr.bf16.mxu0 0
    %920 = vmatpush1.bf16.msra.mxu0 0
    %921 = vmatprep.subr.bf16.mxu0 0
    %922 = vmatpush1.bf16.msra.mxu0 0
    %923 = vmatprep.subr.bf16.mxu0 0
    %924 = vmatpush1.bf16.msra.mxu0 0
    %925 = vmatprep.subr.bf16.mxu0 0
    %926 = vmatpush1.bf16.msra.mxu0 0
    %927 = vmatprep.subr.bf16.mxu0 0
    %928 = vmatpush1.bf16.msra.mxu0 0
    %929 = vmatprep.subr.bf16.mxu0 0
    %930 = vmatpush1.bf16.msra.mxu0 0
    %931 = vmatprep.subr.bf16.mxu0 0
    %932 = vmatpush1.bf16.msra.mxu0 %v182
    %933 = vmatprep.subr.bf16.mxu0 0
    %934 = vmatpush1.bf16.msra.mxu0 %v181
    %935 = vmatprep.subr.bf16.mxu0 0
    %936 = vmatpush2.bf16.msra.mxu0 0
    %937 = vmatprep.subr.bf16.mxu0 0
    %938 = vmatpush2.bf16.msra.mxu0 0
    %939 = vmatprep.subr.bf16.mxu0 0
    %940 = vmatpush2.bf16.msra.mxu0 0
    %941 = vmatprep.subr.bf16.mxu0 0
    %942 = vmatpush2.bf16.msra.mxu0 0
    %943 = vmatprep.subr.bf16.mxu0 0
    %944 = vmatpush2.bf16.msra.mxu0 0
    %945 = vmatprep.subr.bf16.mxu0 0
    %946 = vmatpush2.bf16.msra.mxu0 0
    %947 = vmatprep.subr.bf16.mxu0 0
    %948 = vmatpush2.bf16.msra.mxu0 0
    %949 = vmatprep.subr.bf16.mxu0 0
    %950 = vmatpush2.bf16.msra.mxu0 0
    %951 = vmatprep.mubr.bf16.mxu0 0
    %952 = vmatmul.mubr.bf16.gmra.mxu0 %v807
    %v953 = vpop.f32.mrf.mxu0
    %v954 = vadd.f32 %v115, %v953
    %v955 = vpop.f32.mrf.mxu0
    %v956 = vpop.f32.mrf.mxu0
    %v957 = vpop.f32.mrf.mxu0
    %958 = vdwg.mxu0
    %v959 = vmul.f32 %v954, 0.5
    %v960 = vtanh.pop %v959
    %v961 = vmul.f32 %v960, 0.5
    %v962 = vadd.f32 %v961, 0.5
    %v963 = vtanh.pop %v954
    %v964 = vmul.f32 %v962, %v795
    %966 = vrot.lane.b32.xlu0 %v963, 32
    %v967 = vpop.permute.xlu0 %966
    %v969 = vmul.f32 %v962, %v967
    %971 = vrot.lane.b32.xlu0 %v969, 32
    %v972 = vpop.permute.xlu0 %971
    %v974 = vadd.f32 %v964, %v972
    %v975 = vtanh.pop %v974
    %977 = vrot.lane.b32.xlu0 %v975, 32
    %v978 = vpop.permute.xlu0 %977
    %v980 = vmul.f32 %v962, %v978
    %v981 = vpack.c.bf16 %v980, %v980
    %983 = vrot.lane.b32.xlu0 %v981, 64
    %v984 = vpop.permute.xlu0 %983
    %v986 = vsel %vm129, %v984, 0
    %988 = vmatprep.subr.bf16.mxu0 0
    %989 = vmatpush1.bf16.msra.mxu0 0
    %990 = vmatprep.subr.bf16.mxu0 0
    %991 = vmatpush1.bf16.msra.mxu0 0
    %992 = vmatprep.subr.bf16.mxu0 0
    %993 = vmatpush1.bf16.msra.mxu0 0
    %994 = vmatprep.subr.bf16.mxu0 0
    %995 = vmatpush1.bf16.msra.mxu0 0
    %996 = vmatprep.subr.bf16.mxu0 0
    %997 = vmatpush1.bf16.msra.mxu0 0
    %998 = vmatprep.subr.bf16.mxu0 0
    %999 = vmatpush1.bf16.msra.mxu0 0
    %1000 = vmatprep.subr.bf16.mxu0 0
    %1001 = vmatpush1.bf16.msra.mxu0 %v260
    %1002 = vmatprep.subr.bf16.mxu0 0
    %1003 = vmatpush1.bf16.msra.mxu0 %v259
    %1004 = vmatprep.subr.bf16.mxu0 0
    %1005 = vmatpush2.bf16.msra.mxu0 0
    %1006 = vmatprep.subr.bf16.mxu0 0
    %1007 = vmatpush2.bf16.msra.mxu0 0
    %1008 = vmatprep.subr.bf16.mxu0 0
    %1009 = vmatpush2.bf16.msra.mxu0 0
    %1010 = vmatprep.subr.bf16.mxu0 0
    %1011 = vmatpush2.bf16.msra.mxu0 0
    %1012 = vmatprep.subr.bf16.mxu0 0
    %1013 = vmatpush2.bf16.msra.mxu0 0
    %1014 = vmatprep.subr.bf16.mxu0 0
    %1015 = vmatpush2.bf16.msra.mxu0 0
    %1016 = vmatprep.subr.bf16.mxu0 0
    %1017 = vmatpush2.bf16.msra.mxu0 0
    %1018 = vmatprep.subr.bf16.mxu0 0
    %1019 = vmatpush2.bf16.msra.mxu0 0
    %1020 = vmatprep.mubr.bf16.mxu0 0
    %1021 = vmatmul.mubr.bf16.gmra.mxu0 %v986
    %v1022 = vpop.f32.mrf.mxu0
    %v1023 = vadd.f32 %v914, %v1022
    %v1024 = vpop.f32.mrf.mxu0
    %v1025 = vpop.f32.mrf.mxu0
    %v1026 = vpop.f32.mrf.mxu0
    %1027 = vdwg.mxu0
    %v1028 = vadd.f32 %v1023, %v45
    %v1029 = vmul.f32 %v1028, 0.5
    %v1030 = vtanh.pop %v1029
    %v1031 = vmul.f32 %v1030, 0.5
    %v1032 = vadd.f32 %v1031, 0.5
    %v1033 = vtanh.pop %v1028
    %v1034 = vmul.f32 %v1032, %v865
    %1036 = vrot.lane.b32.xlu0 %v1033, 32
    %v1037 = vpop.permute.xlu0 %1036
    %v1039 = vmul.f32 %v1032, %v1037
    %1041 = vrot.lane.b32.xlu0 %v1039, 32
    %v1042 = vpop.permute.xlu0 %1041
    %v1044 = vadd.f32 %v1034, %v1042
    %v1045 = vtanh.pop %v1044
    %1047 = vrot.lane.b32.xlu0 %v1045, 32
    %v1048 = vpop.permute.xlu0 %1047
    %v1050 = vmul.f32 %v1032, %v1048
    %v1051 = vpack.c.bf16 %v1050, %v1050
    %1053 = vrot.lane.b32.xlu0 %v1051, 64
    %v1054 = vpop.permute.xlu0 %1053
    %v1056 = vsel %vm129, %v1054, 0
    %1058 = vmatprep.subr.bf16.mxu0 0
    %1059 = vmatpush1.bf16.msra.mxu0 0
    %1060 = vmatprep.subr.bf16.mxu0 0
    %1061 = vmatpush1.bf16.msra.mxu0 0
    %1062 = vmatprep.subr.bf16.mxu0 0
    %1063 = vmatpush1.bf16.msra.mxu0 0
    %1064 = vmatprep.subr.bf16.mxu0 0
    %1065 = vmatpush1.bf16.msra.mxu0 0
    %1066 = vmatprep.subr.bf16.mxu0 0
    %1067 = vmatpush1.bf16.msra.mxu0 0
    %1068 = vmatprep.subr.bf16.mxu0 0
    %1069 = vmatpush1.bf16.msra.mxu0 0
    %1070 = vmatprep.subr.bf16.mxu0 0
    %1071 = vmatpush1.bf16.msra.mxu0 %v126
    %1072 = vmatprep.subr.bf16.mxu0 0
    %1073 = vmatpush1.bf16.msra.mxu0 %v125
    %1074 = vmatprep.subr.bf16.mxu0 0
    %1075 = vmatpush2.bf16.msra.mxu0 0
    %1076 = vmatprep.subr.bf16.mxu0 0
    %1077 = vmatpush2.bf16.msra.mxu0 0
    %1078 = vmatprep.subr.bf16.mxu0 0
    %1079 = vmatpush2.bf16.msra.mxu0 0
    %1080 = vmatprep.subr.bf16.mxu0 0
    %1081 = vmatpush2.bf16.msra.mxu0 0
    %1082 = vmatprep.subr.bf16.mxu0 0
    %1083 = vmatpush2.bf16.msra.mxu0 0
    %1084 = vmatprep.subr.bf16.mxu0 0
    %1085 = vmatpush2.bf16.msra.mxu0 0
    %1086 = vmatprep.subr.bf16.mxu0 0
    %1087 = vmatpush2.bf16.msra.mxu0 0
    %1088 = vmatprep.subr.bf16.mxu0 0
    %1089 = vmatpush2.bf16.msra.mxu0 0
    %1090 = vmatprep.mubr.bf16.mxu0 0
    %1091 = vmatmul.mubr.bf16.gmra.mxu0 %v1056
    %v1092 = vpop.f32.mrf.mxu0
    %v1093 = vadd.f32 0.0, %v1092
    %v1094 = vpop.f32.mrf.mxu0
    %v1095 = vpop.f32.mrf.mxu0
    %v1096 = vpop.f32.mrf.mxu0
    %1097 = vdwg.mxu0
    %v1099 = vrot.slane %v115, 4
    %1101 = vmatprep.subr.bf16.mxu0 0
    %1102 = vmatpush1.bf16.msra.mxu0 0
    %1103 = vmatprep.subr.bf16.mxu0 0
    %1104 = vmatpush1.bf16.msra.mxu0 0
    %1105 = vmatprep.subr.bf16.mxu0 0
    %1106 = vmatpush1.bf16.msra.mxu0 0
    %1107 = vmatprep.subr.bf16.mxu0 0
    %1108 = vmatpush1.bf16.msra.mxu0 0
    %1109 = vmatprep.subr.bf16.mxu0 0
    %1110 = vmatpush1.bf16.msra.mxu0 0
    %1111 = vmatprep.subr.bf16.mxu0 0
    %1112 = vmatpush1.bf16.msra.mxu0 0
    %1113 = vmatprep.subr.bf16.mxu0 0
    %1114 = vmatpush1.bf16.msra.mxu0 %v182
    %1115 = vmatprep.subr.bf16.mxu0 0
    %1116 = vmatpush1.bf16.msra.mxu0 %v181
    %1117 = vmatprep.subr.bf16.mxu0 0
    %1118 = vmatpush2.bf16.msra.mxu0 0
    %1119 = vmatprep.subr.bf16.mxu0 0
    %1120 = vmatpush2.bf16.msra.mxu0 0
    %1121 = vmatprep.subr.bf16.mxu0 0
    %1122 = vmatpush2.bf16.msra.mxu0 0
    %1123 = vmatprep.subr.bf16.mxu0 0
    %1124 = vmatpush2.bf16.msra.mxu0 0
    %1125 = vmatprep.subr.bf16.mxu0 0
    %1126 = vmatpush2.bf16.msra.mxu0 0
    %1127 = vmatprep.subr.bf16.mxu0 0
    %1128 = vmatpush2.bf16.msra.mxu0 0
    %1129 = vmatprep.subr.bf16.mxu0 0
    %1130 = vmatpush2.bf16.msra.mxu0 0
    %1131 = vmatprep.subr.bf16.mxu0 0
    %1132 = vmatpush2.bf16.msra.mxu0 0
    %1133 = vmatprep.mubr.bf16.mxu0 0
    %1134 = vmatmul.mubr.bf16.gmra.mxu0 %v986
    %v1135 = vpop.f32.mrf.mxu0
    %v1136 = vadd.f32 %v1099, %v1135
    %v1137 = vpop.f32.mrf.mxu0
    %v1138 = vpop.f32.mrf.mxu0
    %v1139 = vpop.f32.mrf.mxu0
    %1140 = vdwg.mxu0
    %v1141 = vmul.f32 %v1136, 0.5
    %v1142 = vtanh.pop %v1141
    %v1143 = vmul.f32 %v1142, 0.5
    %v1144 = vadd.f32 %v1143, 0.5
    %v1145 = vtanh.pop %v1136
    %v1146 = vmul.f32 %v1144, %v974
    %1148 = vrot.lane.b32.xlu0 %v1145, 32
    %v1149 = vpop.permute.xlu0 %1148
    %v1151 = vmul.f32 %v1144, %v1149
    %1153 = vrot.lane.b32.xlu0 %v1151, 32
    %v1154 = vpop.permute.xlu0 %1153
    %v1156 = vadd.f32 %v1146, %v1154
    %v1157 = vtanh.pop %v1156
    %1159 = vrot.lane.b32.xlu0 %v1157, 32
    %v1160 = vpop.permute.xlu0 %1159
    %v1162 = vmul.f32 %v1144, %v1160
    %v1163 = vpack.c.bf16 %v1162, %v1162
    %1165 = vrot.lane.b32.xlu0 %v1163, 64
    %v1166 = vpop.permute.xlu0 %1165
    %v1168 = vsel %vm129, %v1166, 0
    %1170 = vmatprep.subr.bf16.mxu0 0
    %1171 = vmatpush1.bf16.msra.mxu0 0
    %1172 = vmatprep.subr.bf16.mxu0 0
    %1173 = vmatpush1.bf16.msra.mxu0 0
    %1174 = vmatprep.subr.bf16.mxu0 0
    %1175 = vmatpush1.bf16.msra.mxu0 0
    %1176 = vmatprep.subr.bf16.mxu0 0
    %1177 = vmatpush1.bf16.msra.mxu0 0
    %1178 = vmatprep.subr.bf16.mxu0 0
    %1179 = vmatpush1.bf16.msra.mxu0 0
    %1180 = vmatprep.subr.bf16.mxu0 0
    %1181 = vmatpush1.bf16.msra.mxu0 0
    %1182 = vmatprep.subr.bf16.mxu0 0
    %1183 = vmatpush1.bf16.msra.mxu0 %v260
    %1184 = vmatprep.subr.bf16.mxu0 0
    %1185 = vmatpush1.bf16.msra.mxu0 %v259
    %1186 = vmatprep.subr.bf16.mxu0 0
    %1187 = vmatpush2.bf16.msra.mxu0 0
    %1188 = vmatprep.subr.bf16.mxu0 0
    %1189 = vmatpush2.bf16.msra.mxu0 0
    %1190 = vmatprep.subr.bf16.mxu0 0
    %1191 = vmatpush2.bf16.msra.mxu0 0
    %1192 = vmatprep.subr.bf16.mxu0 0
    %1193 = vmatpush2.bf16.msra.mxu0 0
    %1194 = vmatprep.subr.bf16.mxu0 0
    %1195 = vmatpush2.bf16.msra.mxu0 0
    %1196 = vmatprep.subr.bf16.mxu0 0
    %1197 = vmatpush2.bf16.msra.mxu0 0
    %1198 = vmatprep.subr.bf16.mxu0 0
    %1199 = vmatpush2.bf16.msra.mxu0 0
    %1200 = vmatprep.subr.bf16.mxu0 0
    %1201 = vmatpush2.bf16.msra.mxu0 0
    %1202 = vmatprep.mubr.bf16.mxu0 0
    %1203 = vmatmul.mubr.bf16.gmra.mxu0 %v1168
    %v1204 = vpop.f32.mrf.mxu0
    %v1205 = vadd.f32 %v1093, %v1204
    %v1206 = vpop.f32.mrf.mxu0
    %v1207 = vpop.f32.mrf.mxu0
    %v1208 = vpop.f32.mrf.mxu0
    %1209 = vdwg.mxu0
    %v1210 = vadd.f32 %v1205, %v45
    %v1211 = vmul.f32 %v1210, 0.5
    %v1212 = vtanh.pop %v1211
    %v1213 = vmul.f32 %v1212, 0.5
    %v1214 = vadd.f32 %v1213, 0.5
    %v1215 = vtanh.pop %v1210
    %v1216 = vmul.f32 %v1214, %v1044
    %1218 = vrot.lane.b32.xlu0 %v1215, 32
    %v1219 = vpop.permute.xlu0 %1218
    %v1221 = vmul.f32 %v1214, %v1219
    %1223 = vrot.lane.b32.xlu0 %v1221, 32
    %v1224 = vpop.permute.xlu0 %1223
    %v1226 = vadd.f32 %v1216, %v1224
    %v1227 = vtanh.pop %v1226
    %1229 = vrot.lane.b32.xlu0 %v1227, 32
    %v1230 = vpop.permute.xlu0 %1229
    %v1232 = vmul.f32 %v1214, %v1230
    %v1233 = vpack.c.bf16 %v1232, %v1232
    %1235 = vrot.lane.b32.xlu0 %v1233, 64
    %v1236 = vpop.permute.xlu0 %1235
    %v1238 = vsel %vm129, %v1236, 0
    %1240 = vmatprep.subr.bf16.mxu0 0
    %1241 = vmatpush1.bf16.msra.mxu0 0
    %1242 = vmatprep.subr.bf16.mxu0 0
    %1243 = vmatpush1.bf16.msra.mxu0 0
    %1244 = vmatprep.subr.bf16.mxu0 0
    %1245 = vmatpush1.bf16.msra.mxu0 0
    %1246 = vmatprep.subr.bf16.mxu0 0
    %1247 = vmatpush1.bf16.msra.mxu0 0
    %1248 = vmatprep.subr.bf16.mxu0 0
    %1249 = vmatpush1.bf16.msra.mxu0 0
    %1250 = vmatprep.subr.bf16.mxu0 0
    %1251 = vmatpush1.bf16.msra.mxu0 0
    %1252 = vmatprep.subr.bf16.mxu0 0
    %1253 = vmatpush1.bf16.msra.mxu0 %v126
    %1254 = vmatprep.subr.bf16.mxu0 0
    %1255 = vmatpush1.bf16.msra.mxu0 %v125
    %1256 = vmatprep.subr.bf16.mxu0 0
    %1257 = vmatpush2.bf16.msra.mxu0 0
    %1258 = vmatprep.subr.bf16.mxu0 0
    %1259 = vmatpush2.bf16.msra.mxu0 0
    %1260 = vmatprep.subr.bf16.mxu0 0
    %1261 = vmatpush2.bf16.msra.mxu0 0
    %1262 = vmatprep.subr.bf16.mxu0 0
    %1263 = vmatpush2.bf16.msra.mxu0 0
    %1264 = vmatprep.subr.bf16.mxu0 0
    %1265 = vmatpush2.bf16.msra.mxu0 0
    %1266 = vmatprep.subr.bf16.mxu0 0
    %1267 = vmatpush2.bf16.msra.mxu0 0
    %1268 = vmatprep.subr.bf16.mxu0 0
    %1269 = vmatpush2.bf16.msra.mxu0 0
    %1270 = vmatprep.subr.bf16.mxu0 0
    %1271 = vmatpush2.bf16.msra.mxu0 0
    %1272 = vmatprep.mubr.bf16.mxu0 0
    %1273 = vmatmul.mubr.bf16.gmra.mxu0 %v1238
    %v1274 = vpop.f32.mrf.mxu0
    %v1275 = vadd.f32 0.0, %v1274
    %v1276 = vpop.f32.mrf.mxu0
    %v1277 = vpop.f32.mrf.mxu0
    %v1278 = vpop.f32.mrf.mxu0
    %1279 = vdwg.mxu0
    %1280 = vmatprep.subr.bf16.mxu0 0
    %1281 = vmatpush1.bf16.msra.mxu0 0
    %1282 = vmatprep.subr.bf16.mxu0 0
    %1283 = vmatpush1.bf16.msra.mxu0 0
    %1284 = vmatprep.subr.bf16.mxu0 0
    %1285 = vmatpush1.bf16.msra.mxu0 0
    %1286 = vmatprep.subr.bf16.mxu0 0
    %1287 = vmatpush1.bf16.msra.mxu0 0
    %1288 = vmatprep.subr.bf16.mxu0 0
    %1289 = vmatpush1.bf16.msra.mxu0 0
    %1290 = vmatprep.subr.bf16.mxu0 0
    %1291 = vmatpush1.bf16.msra.mxu0 0
    %1292 = vmatprep.subr.bf16.mxu0 0
    %1293 = vmatpush1.bf16.msra.mxu0 %v182
    %1294 = vmatprep.subr.bf16.mxu0 0
    %1295 = vmatpush1.bf16.msra.mxu0 %v181
    %1296 = vmatprep.subr.bf16.mxu0 0
    %1297 = vmatpush2.bf16.msra.mxu0 0
    %1298 = vmatprep.subr.bf16.mxu0 0
    %1299 = vmatpush2.bf16.msra.mxu0 0
    %1300 = vmatprep.subr.bf16.mxu0 0
    %1301 = vmatpush2.bf16.msra.mxu0 0
    %1302 = vmatprep.subr.bf16.mxu0 0
    %1303 = vmatpush2.bf16.msra.mxu0 0
    %1304 = vmatprep.subr.bf16.mxu0 0
    %1305 = vmatpush2.bf16.msra.mxu0 0
    %1306 = vmatprep.subr.bf16.mxu0 0
    %1307 = vmatpush2.bf16.msra.mxu0 0
    %1308 = vmatprep.subr.bf16.mxu0 0
    %1309 = vmatpush2.bf16.msra.mxu0 0
    %1310 = vmatprep.subr.bf16.mxu0 0
    %1311 = vmatpush2.bf16.msra.mxu0 0
    %1312 = vmatprep.mubr.bf16.mxu0 0
    %1313 = vmatmul.mubr.bf16.gmra.mxu0 %v1168
    %v1314 = vpop.f32.mrf.mxu0
    %v1315 = vadd.f32 %v116, %v1314
    %v1316 = vpop.f32.mrf.mxu0
    %v1317 = vpop.f32.mrf.mxu0
    %v1318 = vpop.f32.mrf.mxu0
    %1319 = vdwg.mxu0
    %v1320 = vmul.f32 %v1315, 0.5
    %v1321 = vtanh.pop %v1320
    %v1322 = vmul.f32 %v1321, 0.5
    %v1323 = vadd.f32 %v1322, 0.5
    %v1324 = vtanh.pop %v1315
    %v1325 = vmul.f32 %v1323, %v1156
    %1327 = vrot.lane.b32.xlu0 %v1324, 32
    %v1328 = vpop.permute.xlu0 %1327
    %v1330 = vmul.f32 %v1323, %v1328
    %1332 = vrot.lane.b32.xlu0 %v1330, 32
    %v1333 = vpop.permute.xlu0 %1332
    %v1335 = vadd.f32 %v1325, %v1333
    %v1336 = vtanh.pop %v1335
    %1338 = vrot.lane.b32.xlu0 %v1336, 32
    %v1339 = vpop.permute.xlu0 %1338
    %v1341 = vmul.f32 %v1323, %v1339
    %v1342 = vpack.c.bf16 %v1341, %v1341
    %1344 = vrot.lane.b32.xlu0 %v1342, 64
    %v1345 = vpop.permute.xlu0 %1344
    %v1347 = vsel %vm129, %v1345, 0
    %1349 = vmatprep.subr.bf16.mxu0 0
    %1350 = vmatpush1.bf16.msra.mxu0 0
    %1351 = vmatprep.subr.bf16.mxu0 0
    %1352 = vmatpush1.bf16.msra.mxu0 0
    %1353 = vmatprep.subr.bf16.mxu0 0
    %1354 = vmatpush1.bf16.msra.mxu0 0
    %1355 = vmatprep.subr.bf16.mxu0 0
    %1356 = vmatpush1.bf16.msra.mxu0 0
    %1357 = vmatprep.subr.bf16.mxu0 0
    %1358 = vmatpush1.bf16.msra.mxu0 0
    %1359 = vmatprep.subr.bf16.mxu0 0
    %1360 = vmatpush1.bf16.msra.mxu0 0
    %1361 = vmatprep.subr.bf16.mxu0 0
    %1362 = vmatpush1.bf16.msra.mxu0 %v260
    %1363 = vmatprep.subr.bf16.mxu0 0
    %1364 = vmatpush1.bf16.msra.mxu0 %v259
    %1365 = vmatprep.subr.bf16.mxu0 0
    %1366 = vmatpush2.bf16.msra.mxu0 0
    %1367 = vmatprep.subr.bf16.mxu0 0
    %1368 = vmatpush2.bf16.msra.mxu0 0
    %1369 = vmatprep.subr.bf16.mxu0 0
    %1370 = vmatpush2.bf16.msra.mxu0 0
    %1371 = vmatprep.subr.bf16.mxu0 0
    %1372 = vmatpush2.bf16.msra.mxu0 0
    %1373 = vmatprep.subr.bf16.mxu0 0
    %1374 = vmatpush2.bf16.msra.mxu0 0
    %1375 = vmatprep.subr.bf16.mxu0 0
    %1376 = vmatpush2.bf16.msra.mxu0 0
    %1377 = vmatprep.subr.bf16.mxu0 0
    %1378 = vmatpush2.bf16.msra.mxu0 0
    %1379 = vmatprep.subr.bf16.mxu0 0
    %1380 = vmatpush2.bf16.msra.mxu0 0
    %1381 = vmatprep.mubr.bf16.mxu0 0
    %1382 = vmatmul.mubr.bf16.gmra.mxu0 %v1347
    %v1383 = vpop.f32.mrf.mxu0
    %v1384 = vadd.f32 %v1275, %v1383
    %v1385 = vpop.f32.mrf.mxu0
    %v1386 = vpop.f32.mrf.mxu0
    %v1387 = vpop.f32.mrf.mxu0
    %1388 = vdwg.mxu0
    %v1389 = vadd.f32 %v1384, %v45
    %v1390 = vmul.f32 %v1389, 0.5
    %v1391 = vtanh.pop %v1390
    %v1392 = vmul.f32 %v1391, 0.5
    %v1393 = vadd.f32 %v1392, 0.5
    %v1394 = vtanh.pop %v1389
    %v1395 = vmul.f32 %v1393, %v1226
    %1397 = vrot.lane.b32.xlu0 %v1394, 32
    %v1398 = vpop.permute.xlu0 %1397
    %v1400 = vmul.f32 %v1393, %v1398
    %1402 = vrot.lane.b32.xlu0 %v1400, 32
    %v1403 = vpop.permute.xlu0 %1402
    %v1405 = vadd.f32 %v1395, %v1403
    %v1406 = vtanh.pop %v1405
    %1408 = vrot.lane.b32.xlu0 %v1406, 32
    %v1409 = vpop.permute.xlu0 %1408
    %v1411 = vmul.f32 %v1393, %v1409
    %v1412 = vpack.c.bf16 %v1411, %v1411
    %1414 = vrot.lane.b32.xlu0 %v1412, 64
    %v1415 = vpop.permute.xlu0 %1414
    %v1417 = vsel %vm129, %v1415, 0
    %1419 = vmatprep.subr.bf16.mxu0 0
    %1420 = vmatpush1.bf16.msra.mxu0 0
    %1421 = vmatprep.subr.bf16.mxu0 0
    %1422 = vmatpush1.bf16.msra.mxu0 0
    %1423 = vmatprep.subr.bf16.mxu0 0
    %1424 = vmatpush1.bf16.msra.mxu0 0
    %1425 = vmatprep.subr.bf16.mxu0 0
    %1426 = vmatpush1.bf16.msra.mxu0 0
    %1427 = vmatprep.subr.bf16.mxu0 0
    %1428 = vmatpush1.bf16.msra.mxu0 0
    %1429 = vmatprep.subr.bf16.mxu0 0
    %1430 = vmatpush1.bf16.msra.mxu0 0
    %1431 = vmatprep.subr.bf16.mxu0 0
    %1432 = vmatpush1.bf16.msra.mxu0 %v126
    %1433 = vmatprep.subr.bf16.mxu0 0
    %1434 = vmatpush1.bf16.msra.mxu0 %v125
    %1435 = vmatprep.subr.bf16.mxu0 0
    %1436 = vmatpush2.bf16.msra.mxu0 0
    %1437 = vmatprep.subr.bf16.mxu0 0
    %1438 = vmatpush2.bf16.msra.mxu0 0
    %1439 = vmatprep.subr.bf16.mxu0 0
    %1440 = vmatpush2.bf16.msra.mxu0 0
    %1441 = vmatprep.subr.bf16.mxu0 0
    %1442 = vmatpush2.bf16.msra.mxu0 0
    %1443 = vmatprep.subr.bf16.mxu0 0
    %1444 = vmatpush2.bf16.msra.mxu0 0
    %1445 = vmatprep.subr.bf16.mxu0 0
    %1446 = vmatpush2.bf16.msra.mxu0 0
    %1447 = vmatprep.subr.bf16.mxu0 0
    %1448 = vmatpush2.bf16.msra.mxu0 0
    %1449 = vmatprep.subr.bf16.mxu0 0
    %1450 = vmatpush2.bf16.msra.mxu0 0
    %1451 = vmatprep.mubr.bf16.mxu0 0
    %1452 = vmatmul.mubr.bf16.gmra.mxu0 %v1417
    %v1453 = vpop.f32.mrf.mxu0
    %v1454 = vadd.f32 0.0, %v1453
    %v1455 = vpop.f32.mrf.mxu0
    %v1456 = vpop.f32.mrf.mxu0
    %v1457 = vpop.f32.mrf.mxu0
    %1458 = vdwg.mxu0
    %v1460 = vrot.slane %v116, 4
    %1462 = vmatprep.subr.bf16.mxu0 0
    %1463 = vmatpush1.bf16.msra.mxu0 0
    %1464 = vmatprep.subr.bf16.mxu0 0
    %1465 = vmatpush1.bf16.msra.mxu0 0
    %1466 = vmatprep.subr.bf16.mxu0 0
    %1467 = vmatpush1.bf16.msra.mxu0 0
    %1468 = vmatprep.subr.bf16.mxu0 0
    %1469 = vmatpush1.bf16.msra.mxu0 0
    %1470 = vmatprep.subr.bf16.mxu0 0
    %1471 = vmatpush1.bf16.msra.mxu0 0
    %1472 = vmatprep.subr.bf16.mxu0 0
    %1473 = vmatpush1.bf16.msra.mxu0 0
    %1474 = vmatprep.subr.bf16.mxu0 0
    %1475 = vmatpush1.bf16.msra.mxu0 %v182
    %1476 = vmatprep.subr.bf16.mxu0 0
    %1477 = vmatpush1.bf16.msra.mxu0 %v181
    %1478 = vmatprep.subr.bf16.mxu0 0
    %1479 = vmatpush2.bf16.msra.mxu0 0
    %1480 = vmatprep.subr.bf16.mxu0 0
    %1481 = vmatpush2.bf16.msra.mxu0 0
    %1482 = vmatprep.subr.bf16.mxu0 0
    %1483 = vmatpush2.bf16.msra.mxu0 0
    %1484 = vmatprep.subr.bf16.mxu0 0
    %1485 = vmatpush2.bf16.msra.mxu0 0
    %1486 = vmatprep.subr.bf16.mxu0 0
    %1487 = vmatpush2.bf16.msra.mxu0 0
    %1488 = vmatprep.subr.bf16.mxu0 0
    %1489 = vmatpush2.bf16.msra.mxu0 0
    %1490 = vmatprep.subr.bf16.mxu0 0
    %1491 = vmatpush2.bf16.msra.mxu0 0
    %1492 = vmatprep.subr.bf16.mxu0 0
    %1493 = vmatpush2.bf16.msra.mxu0 0
    %1494 = vmatprep.mubr.bf16.mxu0 0
    %1495 = vmatmul.mubr.bf16.gmra.mxu0 %v1347
    %v1496 = vpop.f32.mrf.mxu0
    %v1497 = vadd.f32 %v1460, %v1496
    %v1498 = vpop.f32.mrf.mxu0
    %v1499 = vpop.f32.mrf.mxu0
    %v1500 = vpop.f32.mrf.mxu0
    %1501 = vdwg.mxu0
    %v1502 = vmul.f32 %v1497, 0.5
    %v1503 = vtanh.pop %v1502
    %v1504 = vmul.f32 %v1503, 0.5
    %v1505 = vadd.f32 %v1504, 0.5
    %v1506 = vtanh.pop %v1497
    %v1507 = vmul.f32 %v1505, %v1335
    %1509 = vrot.lane.b32.xlu0 %v1506, 32
    %v1510 = vpop.permute.xlu0 %1509
    %v1512 = vmul.f32 %v1505, %v1510
    %1514 = vrot.lane.b32.xlu0 %v1512, 32
    %v1515 = vpop.permute.xlu0 %1514
    %v1517 = vadd.f32 %v1507, %v1515
    %v1518 = vtanh.pop %v1517
    %1520 = vrot.lane.b32.xlu0 %v1518, 32
    %v1521 = vpop.permute.xlu0 %1520
    %v1523 = vmul.f32 %v1505, %v1521
    %v1524 = vpack.c.bf16 %v1523, %v1523
    %1526 = vrot.lane.b32.xlu0 %v1524, 64
    %v1527 = vpop.permute.xlu0 %1526
    %v1529 = vsel %vm129, %v1527, 0
    %1531 = vmatprep.subr.bf16.mxu0 0
    %1532 = vmatpush1.bf16.msra.mxu0 0
    %1533 = vmatprep.subr.bf16.mxu0 0
    %1534 = vmatpush1.bf16.msra.mxu0 0
    %1535 = vmatprep.subr.bf16.mxu0 0
    %1536 = vmatpush1.bf16.msra.mxu0 0
    %1537 = vmatprep.subr.bf16.mxu0 0
    %1538 = vmatpush1.bf16.msra.mxu0 0
    %1539 = vmatprep.subr.bf16.mxu0 0
    %1540 = vmatpush1.bf16.msra.mxu0 0
    %1541 = vmatprep.subr.bf16.mxu0 0
    %1542 = vmatpush1.bf16.msra.mxu0 0
    %1543 = vmatprep.subr.bf16.mxu0 0
    %1544 = vmatpush1.bf16.msra.mxu0 %v260
    %1545 = vmatprep.subr.bf16.mxu0 0
    %1546 = vmatpush1.bf16.msra.mxu0 %v259
    %1547 = vmatprep.subr.bf16.mxu0 0
    %1548 = vmatpush2.bf16.msra.mxu0 0
    %1549 = vmatprep.subr.bf16.mxu0 0
    %1550 = vmatpush2.bf16.msra.mxu0 0
    %1551 = vmatprep.subr.bf16.mxu0 0
    %1552 = vmatpush2.bf16.msra.mxu0 0
    %1553 = vmatprep.subr.bf16.mxu0 0
    %1554 = vmatpush2.bf16.msra.mxu0 0
    %1555 = vmatprep.subr.bf16.mxu0 0
    %1556 = vmatpush2.bf16.msra.mxu0 0
    %1557 = vmatprep.subr.bf16.mxu0 0
    %1558 = vmatpush2.bf16.msra.mxu0 0
    %1559 = vmatprep.subr.bf16.mxu0 0
    %1560 = vmatpush2.bf16.msra.mxu0 0
    %1561 = vmatprep.subr.bf16.mxu0 0
    %1562 = vmatpush2.bf16.msra.mxu0 0
    %1563 = vmatprep.mubr.bf16.mxu0 0
    %1564 = vmatmul.mubr.bf16.gmra.mxu0 %v1529
    %v1565 = vpop.f32.mrf.mxu0
    %v1566 = vadd.f32 %v1454, %v1565
    %v1567 = vpop.f32.mrf.mxu0
    %v1568 = vpop.f32.mrf.mxu0
    %v1569 = vpop.f32.mrf.mxu0
    %1570 = vdwg.mxu0
    %v1571 = vadd.f32 %v1566, %v45
    %v1572 = vmul.f32 %v1571, 0.5
    %v1573 = vtanh.pop %v1572
    %v1574 = vmul.f32 %v1573, 0.5
    %v1575 = vadd.f32 %v1574, 0.5
    %v1576 = vtanh.pop %v1571
    %v1577 = vmul.f32 %v1575, %v1405
    %1579 = vrot.lane.b32.xlu0 %v1576, 32
    %v1580 = vpop.permute.xlu0 %1579
    %v1582 = vmul.f32 %v1575, %v1580
    %1584 = vrot.lane.b32.xlu0 %v1582, 32
    %v1585 = vpop.permute.xlu0 %1584
    %v1587 = vadd.f32 %v1577, %v1585
    %v1588 = vtanh.pop %v1587
    %1590 = vrot.lane.b32.xlu0 %v1588, 32
    %v1591 = vpop.permute.xlu0 %1590
    %v1593 = vmul.f32 %v1575, %v1591
    %v1594 = vld [vmem:[%s2 + $0x4] sm:$0x1]
    %v1595 = vld [vmem:[%s2 + $0x5] sm:$0x1]
    %v1596 = vlaneseq
    %v1597 = vshrl.u32 %v1596, 7
    %v1598 = vsub.s32 0, %v1597
    %v1599 = vrot.slane %v1594, %v1598
    %1601 = vrot.lane.b32.xlu0 %v1599, 64
    %v1602 = vpop.permute.xlu0 %1601
    %v1604 = vmul.f32 %v1593, %v1602
    %1606 = vrot.lane.b32.xlu0 %v1604, 64
    %v1607 = vpop.permute.xlu0 %1606
    %vm1609 = vcmask 257024
    %v1610 = vsel %vm1609, %v1607, 0.0
    %1611 = vadd.xlane.f32.xlu0 %v1610
    %v1612 = vpop.xlane.xlu0 %1611
    %v1613 = vlaneseq
    %v1614 = vshrl.u32 %v1613, 7
    %v1615 = vsub.s32 0, %v1614
    %v1616 = vrot.slane %v1595, %v1615
    %v1617 = vadd.f32 %v1612, %v1616
    %vm1618 = vcmask 3072
    %1619 = vst.msk [vmem:[%s3] sm:$0xf] %vm1618, %v1617
    // Predicated region
    $region18: #{discriminator_forward.1} parent=1 // pred_check
      _
    $region19: #{discriminator_forward.1} parent=1 // pred_check_branch
      %1621 = sbr.rel (0) target = $region21
    $region20: #{discriminator_forward.1} parent=1 // pred_region
      _
    $region21: #{discriminator_forward.1} parent=1 // pred_fallthru
      _
    // Predicated region
    $region22: #{discriminator_forward.1} parent=1 // pred_check
      _
    $region23: #{discriminator_forward.1} parent=1 // pred_check_branch
      %1623 = sbr.rel (0) target = $region25
    $region24: #{discriminator_forward.1} parent=1 // pred_region
      _
    $region25: #{discriminator_forward.1} parent=1 // pred_fallthru
      _
    %1624 = vsyncpa [#allocation3], 1

</llo_original>
